<compile_context>
chip_gen: v6e
topology: v6e:2x2x1
jax: 0.10.0
libtpu: 0.0.40
codegen_flags: <defaults>
</compile_context>

<pallas_src>
import functools

import numpy as np

import jax
import jax.numpy as jnp
from jax.experimental import pallas as pl
from jax.experimental.pallas import tpu as pltpu


# ---------------------------------------------------------------------------
# layer classification
# ---------------------------------------------------------------------------
def _layer_kinds(size):
    """Per layer: 'ew' (in_features==1), 'vr' (out_features==1), 'mm' (block-diag matmul)."""
    kinds = []
    for i in range(1, len(size)):
        n_in, n_out = abs(size[i - 1]), abs(size[i])
        if n_in == 1:
            kinds.append(("ew", n_in, n_out))
        elif n_out == 1:
            kinds.append(("vr", n_in, n_out))
        else:
            kinds.append(("mm", n_in, n_out))
    return kinds


# ---------------------------------------------------------------------------
# Pallas kernel: one grid step = one N-tile through ALL D fused FNNs
# ---------------------------------------------------------------------------
def _tnn_parfree_kernel(kinds, D, *refs):
    """refs = (x_ref, wq_ref, w_0, b_0, ..., w_{L-1}, b_{L-1}, out_ref, sum_scratch)

    Per grid step j (one tile of tn quadrature points):
      x_ref  : (D*n0, tn)          input tile
      wq_ref : (1, tn)             quadrature-weight tile
      'ew'   : w,b (D, n_out, 1)   elementwise W*x+b (VPU)
      'mm'   : w (D*n_out, D*n_in) block-diagonal fused matmul (MXU), b (D*n_out, 1)
      'vr'   : w (D, n_in, 1), b (D, 1)   out_features==1: VPU mul + grouped reduce
      out    : (n_blocks, D*n_last, tn)   VMEM-resident; normalized on the last step
      s_ref  : (D*n_last, 1)       running sum_N(w*phi^2) accumulator (scratch)
    """
    n_layers = len(kinds)
    x_ref, wq_ref = refs[0], refs[1]
    p_refs = refs[2:2 + 2 * n_layers]
    out_ref = refs[2 + 2 * n_layers]
    s_ref = refs[3 + 2 * n_layers]

    j = pl.program_id(0)

    @pl.when(j == 0)
    def _init():
        s_ref[...] = jnp.zeros_like(s_ref)

    h = x_ref[...].astype(jnp.float32)                        # (D*n0, tn)
    tn = h.shape[-1]
    for i, (kind, n_in, n_out) in enumerate(kinds):
        w = p_refs[2 * i][...].astype(jnp.float32)
        b = p_refs[2 * i + 1][...].astype(jnp.float32)
        if kind == "ew":
            # in_features == 1: "W * x + b", pure VPU (lane + sublane broadcasts).
            h = (w * h[:, None, :] + b).reshape(D * n_out, tn)
        elif kind == "mm":
            # All D FNNs fused into one block-diagonal matmul -> fills the MXU.
            h = jnp.dot(w, h, preferred_element_type=jnp.float32) + b
        else:  # "vr": out_features == 1 -> VPU mul + grouped reduce (no 1-row matmul).
            h = jnp.sum(w * h.reshape(D, n_in, tn), axis=1) + b
        if i < n_layers - 1:
            h = jnp.tanh(h)                                   # hidden activation (EUP)

    phi = h                                                   # (D*n_last, tn)
    wq = wq_ref[...].astype(jnp.float32)                      # (1, tn)
    s_ref[...] += jnp.sum(wq * phi * phi, axis=-1, keepdims=True)

    # Store this tile's (unnormalized) phi into the VMEM-resident output slab.
    out_ref[j] = phi.astype(out_ref.dtype)

    @pl.when(j == pl.num_programs(0) - 1)
    def _finalize():
        inv = jax.lax.rsqrt(s_ref[...])                       # (D*n_last, 1)
        out_ref[...] = (out_ref[...] * inv[None, :, :]).astype(out_ref.dtype)


# ---------------------------------------------------------------------------
# host-side parameter packing (done ONCE, in NumPy -> no per-call HLO)
# ---------------------------------------------------------------------------
def _pack_params(size, D, params):
    kinds = _layer_kinds(size)
    eye = np.eye(D, dtype=np.float32)
    packed = []
    for i, (kind, n_in, n_out) in enumerate(kinds):
        W = np.asarray(params["weights"][i], dtype=np.float32)       # (D, n_out, n_in)
        B = params["biases"][i]
        if B is None:                                                # size[i] <= 0: no bias
            B = np.zeros((D, n_out, 1), np.float32)                  # adding zeros == no bias
        B = np.asarray(B, dtype=np.float32)
        if kind == "ew":                                             # n_in == 1
            w = W.reshape(D, n_out, 1)
            b = B.reshape(D, n_out, 1)
        elif kind == "vr":                                           # n_out == 1
            w = np.swapaxes(W, 1, 2)                                 # (D, n_in, 1)
            b = B.reshape(D, 1)
        else:                                                        # block-diagonal matmul
            blk = W[:, None, :, :] * eye[:, :, None, None]           # (D, D, n_out, n_in)
            w = blk.transpose(0, 2, 1, 3).reshape(D * n_out, D * n_in)
            b = B.reshape(D * n_out, 1)
        packed.extend([jnp.asarray(w), jnp.asarray(b)])
    return kinds, packed


# ---------------------------------------------------------------------------
# forward factory: packs parameters once, returns a jitted (w_quad, x) -> (alpha, phi_n)
# ---------------------------------------------------------------------------
def make_tnn_parfree_forward(size, dim, p, params, *, tn=256):
    """tn = quadrature-point tile width (multiple of 128; 256 fills the v6e/v7x MXU result).

    NOTE: this single-chunk kernel is sized for D * hidden_width <= ~256 (full MXU tile).
    For larger D, add a "parallel" D-chunk grid axis (keeping each chunk's block-diagonal
    weight at <= 256 contract) instead of growing the block-diag matrix quadratically;
    on v7x budget VMEM for the 64 MiB/TC physical limit.
    """
    D = dim * p
    n0, n_last = abs(size[0]), abs(size[-1])
    kinds, packed = _pack_params(size, D, params)      # hoisted: packed exactly once
    alpha = jnp.asarray(params["alpha"], jnp.float32)
    param_bytes = sum(int(a.size) * a.dtype.itemsize for a in packed)

    def forward(w_quad, x):
        N = x.shape[-1]
        assert x.shape == (D, n0, N)
        assert tn % 128 == 0 and N % tn == 0, "N must be a multiple of tn (tn % 128 == 0)"
        n_blocks = N // tn

        x2d = x.reshape(D * n0, N).astype(jnp.float32)
        wq2d = w_quad.reshape(1, N).astype(jnp.float32)

        in_specs = [
            pl.BlockSpec((D * n0, tn), lambda j: (0, j)),    # x: pipelined along N
            pl.BlockSpec((1, tn), lambda j: (0, j)),         # quadrature weights tile
        ]
        for arr in packed:
            # Constant index_map -> weights DMA'd once, resident in VMEM for all steps.
            in_specs.append(
                pl.BlockSpec(tuple(arr.shape), lambda j, _nd=arr.ndim: (0,) * _nd))

        # Output slab stays VMEM-resident across the whole grid (constant index map);
        # it is normalized + flushed to HBM only after the last N-tile.
        out_spec = pl.BlockSpec((n_blocks, D * n_last, tn), lambda j: (0, 0, 0))

        # Advisory cost estimate (effective flops, tanh count, HBM bytes).
        flops, trans = 0, 0
        for i, (kind, n_in, n_out) in enumerate(kinds):
            flops += 2 * D * n_out * n_in * N
            if i < len(kinds) - 1:
                trans += D * n_out * N
        flops += 4 * D * n_last * N                          # norm accumulate + scale
        bytes_accessed = (x2d.size + wq2d.size + n_blocks * D * n_last * tn) * 4 + param_bytes

        phi_tiles = pl.pallas_call(
            functools.partial(_tnn_parfree_kernel, kinds, D),
            out_shape=jax.ShapeDtypeStruct((n_blocks, D * n_last, tn), jnp.float32),
            grid_spec=pltpu.PrefetchScalarGridSpec(
                num_scalar_prefetch=0,
                grid=(n_blocks,),
                in_specs=in_specs,
                out_specs=out_spec,
                scratch_shapes=[pltpu.VMEM((D * n_last, 1), jnp.float32)],
            ),
            compiler_params=pltpu.CompilerParams(
                # N axis is a reduction (output + scratch persist across it).
                dimension_semantics=("arbitrary",),
                vmem_limit_bytes=32 * 1024 * 1024,
            ),
            cost_estimate=pl.CostEstimate(
                flops=int(flops), transcendentals=int(trans),
                bytes_accessed=int(bytes_accessed)),
        )(x2d, wq2d, *packed)

        # (n_blocks, D*n_last, tn) -> (D*n_last, N): rows ordered d*n_last + k, matching
        # torch's `.squeeze().view(dim, p, -1)` (explicit reshape, no squeeze pitfalls).
        phi_norm = jnp.transpose(phi_tiles, (1, 0, 2)).reshape(D * n_last, N)
        out = phi_norm.reshape(dim, p, n_last * N)
        return alpha, out

    return jax.jit(forward)


# ---------------------------------------------------------------------------
# deterministic parameter init (orthogonal W as in the module; small random biases so the
# bias-add path is actually exercised by the correctness check — module init uses zeros)
# ---------------------------------------------------------------------------
def init_params(key, size, dim, p):
    D = dim * p
    weights, biases = [], []
    for i in range(1, len(size)):
        n2, n1 = abs(size[i]), abs(size[i - 1])
        rows, cols = (n2, n1) if n2 >= n1 else (n1, n2)
        a = np.asarray(jax.random.normal(jax.random.fold_in(key, i), (D, rows, cols),
                                         dtype=jnp.float32))
        q, r = np.linalg.qr(a)                                       # batched host-side QR
        d = np.sign(np.diagonal(r, axis1=-2, axis2=-1))
        d = np.where(d == 0.0, 1.0, d)
        q = q * d[:, None, :]
        if n2 < n1:
            q = np.swapaxes(q, 1, 2)
        weights.append(jnp.asarray(q[:, :n2, :n1], dtype=jnp.float32))  # [D, n2, n1]
        if size[i] > 0:
            kb = jax.random.fold_in(key, 1000 + i)
            biases.append(0.1 * jax.random.normal(kb, (D, n2, 1), dtype=jnp.float32))
        else:
            biases.append(None)
    alpha = jnp.ones((p,), jnp.float32)                              # TNN_Scaling init = 1
    return {"weights": weights, "biases": biases, "alpha": alpha}


# ---------------------------------------------------------------------------
# pure-JAX reference for sanity checking
# ---------------------------------------------------------------------------
def reference_forward(size, dim, p, w_quad, x, params):
    n_layers = len(size) - 1
    h = x
    for i in range(n_layers):
        w = params["weights"][i]
        b = params["biases"][i]
        if abs(size[i]) == 1:
            h = w * h
        else:
            h = jnp.einsum("dij,djn->din", w, h)
        if b is not None:
            h = h + b
        if i < n_layers - 1:
            h = jnp.tanh(h)
    phi = h
    s = jnp.sum(w_quad[None, None, :] * phi * phi, axis=2, keepdims=True)
    out = (phi / jnp.sqrt(s)).reshape(dim, p, -1)
    return params["alpha"], out


# ---------------------------------------------------------------------------
if __name__ == "__main__":
    key = jax.random.PRNGKey(0)

    # (dim, p, size, N, tn)
    configs = [
        (2, 4, [1, 32, 32, 1], 1024, 256),   # all layers biased; D*width=256 full MXU tile, grid=(4,)
        (2, 4, [1, 32, -32, 1], 512, 128),   # one bias-free hidden layer; smaller N tile, grid=(4,)
    ]

    for cfg_id, (dim, p, size, N, tn) in enumerate(configs):
        D = dim * p
        k_par, k_x, k_w = jax.random.split(jax.random.fold_in(key, cfg_id), 3)

        params = init_params(k_par, size, dim, p)
        x = jax.random.uniform(k_x, (D, abs(size[0]), N), jnp.float32, -1.0, 1.0)
        w_quad = jax.random.uniform(k_w, (N,), jnp.float32, 0.5, 1.5)  # quadrature weights

        alpha_ref, phi_ref = reference_forward(size, dim, p, w_quad, x, params)

        fwd = make_tnn_parfree_forward(size, dim, p, params, tn=tn)
        alpha, phi_n = fwd(w_quad, x)
        jax.block_until_ready(phi_n)

        assert phi_n.shape == phi_ref.shape, (phi_n.shape, phi_ref.shape)
        assert jnp.allclose(alpha, alpha_ref)
        assert jnp.allclose(phi_n, phi_ref, atol=1e-5, rtol=1e-5), \
            f"mismatch for config {cfg_id}"

    print("KERNEL_OK")
</pallas_src>

<mosaic_0001>
module attributes {stable_mosaic.version = 11 : i64} {
  func.func @_tnn_parfree_kernel(%arg0: i32, %arg1: memref<8x256xf32, #tpu.memory_space<vmem>>, %arg2: memref<1x256xf32, #tpu.memory_space<vmem>>, %arg3: memref<8x32x1xf32, #tpu.memory_space<vmem>>, %arg4: memref<8x32x1xf32, #tpu.memory_space<vmem>>, %arg5: memref<256x256xf32, #tpu.memory_space<vmem>>, %arg6: memref<256x1xf32, #tpu.memory_space<vmem>>, %arg7: memref<8x32x1xf32, #tpu.memory_space<vmem>>, %arg8: memref<8x1xf32, #tpu.memory_space<vmem>>, %arg9: memref<4x8x256xf32, #tpu.memory_space<vmem>>, %arg10: memref<8x1xf32, #tpu.memory_space<vmem>>) attributes {dimension_semantics = [#tpu.dimension_semantics<arbitrary>], iteration_bounds = array<i64: 4>, scalar_prefetch = 0 : i64, scratch_operands = 1 : i64, tpu.core_type = #tpu.core_type<tc>, window_params = [{transform_indices = @transform_0, window_bounds = array<i64: 8, 256>}, {transform_indices = @transform_1, window_bounds = array<i64: 1, 256>}, {pipeline_mode = #tpu.pipeline_mode<synchronous>, transform_indices = @transform_2, window_bounds = array<i64: 8, 32, 1>}, {pipeline_mode = #tpu.pipeline_mode<synchronous>, transform_indices = @transform_3, window_bounds = array<i64: 8, 32, 1>}, {pipeline_mode = #tpu.pipeline_mode<synchronous>, transform_indices = @transform_4, window_bounds = array<i64: 256, 256>}, {pipeline_mode = #tpu.pipeline_mode<synchronous>, transform_indices = @transform_5, window_bounds = array<i64: 256, 1>}, {pipeline_mode = #tpu.pipeline_mode<synchronous>, transform_indices = @transform_6, window_bounds = array<i64: 8, 32, 1>}, {pipeline_mode = #tpu.pipeline_mode<synchronous>, transform_indices = @transform_7, window_bounds = array<i64: 8, 1>}, {pipeline_mode = #tpu.pipeline_mode<synchronous>, transform_indices = @transform_8, window_bounds = array<i64: 4, 8, 256>}]} {
    %c0_i32 = arith.constant 0 : i32
    %0 = arith.cmpi eq, %arg0, %c0_i32 : i32
    %1 = arith.extui %0 : i1 to i32
    %c0_i32_0 = arith.constant 0 : i32
    %2 = arith.cmpi ne, %1, %c0_i32_0 : i32
    scf.if %2 {
      %cst_28 = arith.constant 0.000000e+00 : f32
      %44 = vector.broadcast %cst_28 : f32 to vector<8x1xf32>
      %c0_29 = arith.constant 0 : index
      %c0_30 = arith.constant 0 : index
      %45 = vector.load %arg10[%c0_29, %c0_30] : memref<8x1xf32, #tpu.memory_space<vmem>>, vector<8x1xf32>
      tpu.vector_store %arg10[%c0_29, %c0_30], %44 {strides = array<i32>} : memref<8x1xf32, #tpu.memory_space<vmem>>, vector<8x1xf32>,
    } else {
    }
    %c0 = arith.constant 0 : index
    %c0_1 = arith.constant 0 : index
    %3 = vector.load %arg1[%c0, %c0_1] : memref<8x256xf32, #tpu.memory_space<vmem>>, vector<8x256xf32>
    %c0_2 = arith.constant 0 : index
    %c0_3 = arith.constant 0 : index
    %c0_4 = arith.constant 0 : index
    %4 = vector.load %arg3[%c0_2, %c0_3, %c0_4] : memref<8x32x1xf32, #tpu.memory_space<vmem>>, vector<8x32x1xf32>
    %c0_5 = arith.constant 0 : index
    %c0_6 = arith.constant 0 : index
    %c0_7 = arith.constant 0 : index
    %5 = vector.load %arg4[%c0_5, %c0_6, %c0_7] : memref<8x32x1xf32, #tpu.memory_space<vmem>>, vector<8x32x1xf32>
    %6 = vector.shape_cast %3 : vector<8x256xf32> to vector<8x1x256xf32>
    %7 = vector.broadcast %4 : vector<8x32x1xf32> to vector<8x32x256xf32>
    %8 = vector.broadcast %6 : vector<8x1x256xf32> to vector<8x32x256xf32>
    %9 = arith.mulf %7, %8 : vector<8x32x256xf32>
    %10 = vector.broadcast %5 : vector<8x32x1xf32> to vector<8x32x256xf32>
    %11 = arith.addf %9, %10 : vector<8x32x256xf32>
    %12 = vector.shape_cast %11 : vector<8x32x256xf32> to vector<256x256xf32>
    %13 = math.tanh %12 : vector<256x256xf32>
    %c0_8 = arith.constant 0 : index
    %c0_9 = arith.constant 0 : index
    %14 = vector.load %arg5[%c0_8, %c0_9] : memref<256x256xf32, #tpu.memory_space<vmem>>, vector<256x256xf32>
    %c0_10 = arith.constant 0 : index
    %c0_11 = arith.constant 0 : index
    %15 = vector.load %arg6[%c0_10, %c0_11] : memref<256x1xf32, #tpu.memory_space<vmem>>, vector<256x1xf32>
    %cst = arith.constant dense<0.000000e+00> : vector<256x256xf32>
    %16 = tpu.matmul %14, %13, %cst {dimension_numbers = #tpu.dot_dimension_numbers<[1], [0], [0], [1], [0, 0, 1, 1], [], []>} : vector<256x256xf32>, vector<256x256xf32>, vector<256x256xf32> -> vector<256x256xf32>
    %17 = vector.broadcast %15 : vector<256x1xf32> to vector<256x256xf32>
    %18 = arith.addf %16, %17 : vector<256x256xf32>
    %19 = math.tanh %18 : vector<256x256xf32>
    %c0_12 = arith.constant 0 : index
    %c0_13 = arith.constant 0 : index
    %c0_14 = arith.constant 0 : index
    %20 = vector.load %arg7[%c0_12, %c0_13, %c0_14] : memref<8x32x1xf32, #tpu.memory_space<vmem>>, vector<8x32x1xf32>
    %c0_15 = arith.constant 0 : index
    %c0_16 = arith.constant 0 : index
    %21 = vector.load %arg8[%c0_15, %c0_16] : memref<8x1xf32, #tpu.memory_space<vmem>>, vector<8x1xf32>
    %22 = vector.shape_cast %19 : vector<256x256xf32> to vector<8x32x256xf32>
    %23 = vector.broadcast %20 : vector<8x32x1xf32> to vector<8x32x256xf32>
    %24 = arith.mulf %23, %22 : vector<8x32x256xf32>
    %cst_17 = arith.constant dense<0.000000e+00> : vector<8x256xf32>
    %25 = vector.multi_reduction <add>, %24, %cst_17 [1] : vector<8x32x256xf32> to vector<8x256xf32>
    %26 = vector.broadcast %21 : vector<8x1xf32> to vector<8x256xf32>
    %27 = arith.addf %25, %26 : vector<8x256xf32>
    %c0_18 = arith.constant 0 : index
    %c0_19 = arith.constant 0 : index
    %28 = vector.load %arg2[%c0_18, %c0_19] : memref<1x256xf32, #tpu.memory_space<vmem>>, vector<1x256xf32>
    %c0_20 = arith.constant 0 : index
    %c0_21 = arith.constant 0 : index
    %29 = vector.load %arg10[%c0_20, %c0_21] : memref<8x1xf32, #tpu.memory_space<vmem>>, vector<8x1xf32>
    %30 = vector.broadcast %28 : vector<1x256xf32> to vector<8x256xf32>
    %31 = arith.mulf %30, %27 : vector<8x256xf32>
    %32 = arith.mulf %31, %27 : vector<8x256xf32>
    %cst_22 = arith.constant dense<0.000000e+00> : vector<8xf32>
    %33 = vector.multi_reduction <add>, %32, %cst_22 [1] : vector<8x256xf32> to vector<8xf32>
    %34 = vector.shape_cast %33 : vector<8xf32> to vector<8x1xf32>
    %35 = arith.addf %29, %34 : vector<8x1xf32>
    %c0_23 = arith.constant 0 : index
    %c0_24 = arith.constant 0 : index
    %36 = vector.load %arg10[%c0_23, %c0_24] : memref<8x1xf32, #tpu.memory_space<vmem>>, vector<8x1xf32>
    tpu.vector_store %arg10[%c0_23, %c0_24], %35 {strides = array<i32>} : memref<8x1xf32, #tpu.memory_space<vmem>>, vector<8x1xf32>,
    %37 = arith.index_cast %arg0 : i32 to index
    %c0_25 = arith.constant 0 : index
    %c0_26 = arith.constant 0 : index
    %38 = vector.load %arg9[%37, %c0_25, %c0_26] : memref<4x8x256xf32, #tpu.memory_space<vmem>>, vector<1x8x256xf32>
    %39 = vector.shape_cast %38 : vector<1x8x256xf32> to vector<8x256xf32>
    %40 = vector.shape_cast %27 : vector<8x256xf32> to vector<1x8x256xf32>
    tpu.vector_store %arg9[%37, %c0_25, %c0_26], %40 {strides = array<i32>} : memref<4x8x256xf32, #tpu.memory_space<vmem>>, vector<1x8x256xf32>,
    %c3_i32 = arith.constant 3 : i32
    %41 = arith.cmpi eq, %arg0, %c3_i32 : i32
    %42 = arith.extui %41 : i1 to i32
    %c0_i32_27 = arith.constant 0 : i32
    %43 = arith.cmpi ne, %42, %c0_i32_27 : i32
    scf.if %43 {
      %c0_28 = arith.constant 0 : index
      %c0_29 = arith.constant 0 : index
      %44 = vector.load %arg10[%c0_28, %c0_29] : memref<8x1xf32, #tpu.memory_space<vmem>>, vector<8x1xf32>
      %45 = math.rsqrt %44 : vector<8x1xf32>
      %c0_30 = arith.constant 0 : index
      %c0_31 = arith.constant 0 : index
      %c0_32 = arith.constant 0 : index
      %46 = vector.load %arg9[%c0_30, %c0_31, %c0_32] : memref<4x8x256xf32, #tpu.memory_space<vmem>>, vector<4x8x256xf32>
      %47 = vector.shape_cast %45 : vector<8x1xf32> to vector<1x8x1xf32>
      %48 = vector.broadcast %47 : vector<1x8x1xf32> to vector<4x8x256xf32>
      %49 = arith.mulf %46, %48 : vector<4x8x256xf32>
      %c0_33 = arith.constant 0 : index
      %c0_34 = arith.constant 0 : index
      %c0_35 = arith.constant 0 : index
      %50 = vector.load %arg9[%c0_33, %c0_34, %c0_35] : memref<4x8x256xf32, #tpu.memory_space<vmem>>, vector<4x8x256xf32>
      tpu.vector_store %arg9[%c0_33, %c0_34, %c0_35], %49 {strides = array<i32>} : memref<4x8x256xf32, #tpu.memory_space<vmem>>, vector<4x8x256xf32>,
    } else {
    }
    return
  }
  func.func @transform_0(%arg0: i32) -> (i32, i32) {
    %c0_i32 = arith.constant 0 : i32
    %c0_i32_0 = arith.constant 0 : i32
    return %c0_i32, %arg0 : i32, i32
  }
  func.func @transform_1(%arg0: i32) -> (i32, i32) {
    %c0_i32 = arith.constant 0 : i32
    %c0_i32_0 = arith.constant 0 : i32
    return %c0_i32, %arg0 : i32, i32
  }
  func.func @transform_2(%arg0: i32) -> (i32, i32, i32) {
    %c0_i32 = arith.constant 0 : i32
    %c0_i32_0 = arith.constant 0 : i32
    %c0_i32_1 = arith.constant 0 : i32
    %c0_i32_2 = arith.constant 0 : i32
    return %c0_i32, %c0_i32_0, %c0_i32_1 : i32, i32, i32
  }
  func.func @transform_3(%arg0: i32) -> (i32, i32, i32) {
    %c0_i32 = arith.constant 0 : i32
    %c0_i32_0 = arith.constant 0 : i32
    %c0_i32_1 = arith.constant 0 : i32
    %c0_i32_2 = arith.constant 0 : i32
    return %c0_i32, %c0_i32_0, %c0_i32_1 : i32, i32, i32
  }
  func.func @transform_4(%arg0: i32) -> (i32, i32) {
    %c0_i32 = arith.constant 0 : i32
    %c0_i32_0 = arith.constant 0 : i32
    %c0_i32_1 = arith.constant 0 : i32
    return %c0_i32, %c0_i32_0 : i32, i32
  }
  func.func @transform_5(%arg0: i32) -> (i32, i32) {
    %c0_i32 = arith.constant 0 : i32
    %c0_i32_0 = arith.constant 0 : i32
    %c0_i32_1 = arith.constant 0 : i32
    return %c0_i32, %c0_i32_0 : i32, i32
  }
  func.func @transform_6(%arg0: i32) -> (i32, i32, i32) {
    %c0_i32 = arith.constant 0 : i32
    %c0_i32_0 = arith.constant 0 : i32
    %c0_i32_1 = arith.constant 0 : i32
    %c0_i32_2 = arith.constant 0 : i32
    return %c0_i32, %c0_i32_0, %c0_i32_1 : i32, i32, i32
  }
  func.func @transform_7(%arg0: i32) -> (i32, i32) {
    %c0_i32 = arith.constant 0 : i32
    %c0_i32_0 = arith.constant 0 : i32
    %c0_i32_1 = arith.constant 0 : i32
    return %c0_i32, %c0_i32_0 : i32, i32
  }
  func.func @transform_8(%arg0: i32) -> (i32, i32, i32) {
    %c0_i32 = arith.constant 0 : i32
    %c0_i32_0 = arith.constant 0 : i32
    %c0_i32_1 = arith.constant 0 : i32
    %c0_i32_2 = arith.constant 0 : i32
    return %c0_i32, %c0_i32_0, %c0_i32_1 : i32, i32, i32
  }
}

</mosaic_0001>

<llo_original>
// kernel: forward.1
$region0: #{forward.1}
  #allocation0 [shape = 'u32[]', space=smem, size = 0x4, offset = 0x4, fixed_abs, tag = 'smem constant byte address 0x4 - core index']
  #allocation1 [shape = 'u32[144,128]{1,0:T(1,128)}', space=vmem, size = 0x12000, scoped, tag = 'internal scratch']
  #allocation2 [shape = 'f32[8,1]{1,0:T(8,128)}', space=vmem, size = 0x1000, scoped, tag = 'scratch operand']
  %s0 = inlined_call_operand.vmem [shape: f32[8,1024], index: 0, kind: input, shape index: {}]
  %s1 = inlined_call_operand.vmem [shape: f32[1,1024], index: 1, kind: input, shape index: {}]
  %s2 = inlined_call_operand.hbm [shape: f32[8,32,1], index: 2, kind: input, shape index: {}]
  %s3 = inlined_call_operand.hbm [shape: f32[8,32,1], index: 3, kind: input, shape index: {}]
  %s4 = inlined_call_operand.hbm [shape: f32[256,256], index: 4, kind: input, shape index: {}]
  %s5 = inlined_call_operand.hbm [shape: f32[256,1], index: 5, kind: input, shape index: {}]
  %s6 = inlined_call_operand.hbm [shape: f32[8,32,1], index: 6, kind: input, shape index: {}]
  %s7 = inlined_call_operand.vmem [shape: f32[8,1], index: 7, kind: input, shape index: {}]
  %s8 = inlined_call_operand.vmem [shape: f32[4,8,256], index: 8, kind: output, shape index: {}]
  %s9 = sld [smem:[#allocation0]]
  $region93: #{forward.1} parent=0
    _
  %s11 = ssub.s32 1, %s9
  %s12 = scalar_select 0, %s11, %s9
  $region1: #{forward.1} parent=0
    #allocation3 [shape = 'u8[131072]{0}', space=vmem, size = 0x20000, scoped, tag = 'input window, operand 2, single buffered']
    #allocation4 [shape = 's32[2]{0}', space=sflag, size = 0x8, scoped, tag = 'scoped memory for forward.1']
    #allocation5 [shape = 'u8[131072]{0}', space=vmem, size = 0x20000, scoped, tag = 'input window, operand 3, single buffered']
    #allocation6 [shape = 's32[1]{0}', space=sflag, size = 0x4, scoped, tag = 'scoped memory for forward.1']
    #allocation7 [shape = 'u8[262144]{0}', space=vmem, size = 0x40000, scoped, tag = 'input window, operand 4, single buffered']
    #allocation8 [shape = 'u8[131072]{0}', space=vmem, size = 0x20000, scoped, tag = 'input window, operand 5, single buffered']
    #allocation9 [shape = 's32[1]{0}', space=sflag, size = 0x4, scoped, tag = 'scoped memory for forward.1']
    #allocation10 [shape = 'u8[131072]{0}', space=vmem, size = 0x20000, scoped, tag = 'input window, operand 6, single buffered']
    %13 = vsyncpa [#allocation4], 0
    %14 = vsyncpa [#allocation6], 0
    %15 = vsyncpa [#allocation9], 0
    loop: start=0, step=1, limit=6
    $region2: #{forward.1} parent=1 // loop_pre_header
      _
    $region3: #{forward.1} parent=1 // loop_header
      %s17 = sphi 0, %s21
      %p18 = scmp.ge.s32.totalorder %s17, 6
      %s27 = sphi 0, %s29
      %s30 = sphi 0, %s27
      %s31 = sphi 0, %s30
      %s47 = sphi 0, %s31
      %s53 = sphi 0, %s55
      %s56 = sphi 0, %s53
      %s57 = sphi 0, %s56
      %s73 = sphi 0, %s57
      %s77 = sphi 0, %s77
      %s79 = sphi 0, %s77
      %s80 = sphi 0, %s79
      %s94 = sphi 0, %s80
      %s98 = sphi 0, %s98
      %s100 = sphi 0, %s98
      %s101 = sphi 0, %s100
      %s115 = sphi 0, %s101
      %s119 = sphi 0, %s119
      %s121 = sphi 0, %s119
      %s122 = sphi 0, %s121
      %s136 = sphi 0, %s122
      %s140 = sphi 0, %s140
      %s142 = sphi 0, %s140
      %s143 = sphi 0, %s142
      %s157 = sphi 0, %s143
      %s161 = sphi 0, %s161
      %s163 = sphi 0, %s161
      %s164 = sphi 0, %s163
      %s178 = sphi 0, %s164
      %s182 = sphi 0, %s182
      %s184 = sphi 0, %s182
      %s185 = sphi 0, %s184
      %s199 = sphi 0, %s185
      %s203 = sphi 0, %s203
      %s205 = sphi 0, %s203
      %s206 = sphi 0, %s205
      %s220 = sphi 0, %s206
    $region4: #{forward.1} parent=1 // loop_header_branch
      %20 = sbr.rel (%p18) target = $region8
    $region5: #{forward.1} parent=1 // loop_body
      %s22 = ssub.s32 %s17, 1
      %s23 = ssub.s32 %s17, 2
      %s24 = sadd.s32 %s17, 1
      %s25 = ssub.s32 %s17, %s24
      %p26 = scmp.eq.s32.totalorder %s25, 0
      %s28 = sadd.s32 %s27, 1
      %s29 = scalar_select %p26, %s27, %s28
      %p32 = pneg %p26
      %p33 = scmp.eq.s32.totalorder %s17, 3
      %p34 = por %p32, %p33
      %p35 = scmp.ne.s32.totalorder %s27, %s30
      %p36 = scmp.eq.s32.totalorder %s17, 0
      %p37 = por %p35, %p36
      %p38 = scmp.ne.s32.totalorder %s27, %s30
      %p39 = scmp.eq.s32.totalorder %s22, 3
      %p40 = por %p38, %p39
      %p41 = scmp.ne.s32.totalorder %s30, %s31
      %p42 = scmp.eq.s32.totalorder %s22, 0
      %p43 = por %p41, %p42
      %p44 = scmp.ne.s32.totalorder %s30, %s31
      %p45 = scmp.eq.s32.totalorder %s23, 3
      %p46 = por %p44, %p45
      %p48 = scmp.ne.s32.totalorder %s31, %s47
      %p49 = scmp.eq.s32.totalorder %s23, 0
      %p50 = por %p48, %p49
      %s51 = ssub.s32 %s17, %s24
      %p52 = scmp.eq.s32.totalorder %s51, 0
      %s54 = sadd.s32 %s53, 1
      %s55 = scalar_select %p52, %s53, %s54
      %p58 = pneg %p52
      %p59 = scmp.eq.s32.totalorder %s17, 3
      %p60 = por %p58, %p59
      %p61 = scmp.ne.s32.totalorder %s53, %s56
      %p62 = scmp.eq.s32.totalorder %s17, 0
      %p63 = por %p61, %p62
      %p64 = scmp.ne.s32.totalorder %s53, %s56
      %p65 = scmp.eq.s32.totalorder %s22, 3
      %p66 = por %p64, %p65
      %p67 = scmp.ne.s32.totalorder %s56, %s57
      %p68 = scmp.eq.s32.totalorder %s22, 0
      %p69 = por %p67, %p68
      %p70 = scmp.ne.s32.totalorder %s56, %s57
      %p71 = scmp.eq.s32.totalorder %s23, 3
      %p72 = por %p70, %p71
      %p74 = scmp.ne.s32.totalorder %s57, %s73
      %p75 = scmp.eq.s32.totalorder %s23, 0
      %p76 = por %p74, %p75
      %s78 = sadd.s32 %s77, 1
      %p81 = scmp.eq.s32.totalorder %s17, 3
      %p82 = scmp.ne.s32.totalorder %s77, %s79
      %p83 = scmp.eq.s32.totalorder %s17, 0
      %p84 = por %p82, %p83
      %p85 = scmp.ne.s32.totalorder %s77, %s79
      %p86 = scmp.eq.s32.totalorder %s22, 3
      %p87 = por %p85, %p86
      %p88 = scmp.ne.s32.totalorder %s79, %s80
      %p89 = scmp.eq.s32.totalorder %s22, 0
      %p90 = por %p88, %p89
      %p91 = scmp.ne.s32.totalorder %s79, %s80
      %p92 = scmp.eq.s32.totalorder %s23, 3
      %p93 = por %p91, %p92
      %p95 = scmp.ne.s32.totalorder %s80, %s94
      %p96 = scmp.eq.s32.totalorder %s23, 0
      %p97 = por %p95, %p96
      %s99 = sadd.s32 %s98, 1
      %p102 = scmp.eq.s32.totalorder %s17, 3
      %p103 = scmp.ne.s32.totalorder %s98, %s100
      %p104 = scmp.eq.s32.totalorder %s17, 0
      %p105 = por %p103, %p104
      %p106 = scmp.ne.s32.totalorder %s98, %s100
      %p107 = scmp.eq.s32.totalorder %s22, 3
      %p108 = por %p106, %p107
      %p109 = scmp.ne.s32.totalorder %s100, %s101
      %p110 = scmp.eq.s32.totalorder %s22, 0
      %p111 = por %p109, %p110
      %p112 = scmp.ne.s32.totalorder %s100, %s101
      %p113 = scmp.eq.s32.totalorder %s23, 3
      %p114 = por %p112, %p113
      %p116 = scmp.ne.s32.totalorder %s101, %s115
      %p117 = scmp.eq.s32.totalorder %s23, 0
      %p118 = por %p116, %p117
      %s120 = sadd.s32 %s119, 1
      %p123 = scmp.eq.s32.totalorder %s17, 3
      %p124 = scmp.ne.s32.totalorder %s119, %s121
      %p125 = scmp.eq.s32.totalorder %s17, 0
      %p126 = por %p124, %p125
      %p127 = scmp.ne.s32.totalorder %s119, %s121
      %p128 = scmp.eq.s32.totalorder %s22, 3
      %p129 = por %p127, %p128
      %p130 = scmp.ne.s32.totalorder %s121, %s122
      %p131 = scmp.eq.s32.totalorder %s22, 0
      %p132 = por %p130, %p131
      %p133 = scmp.ne.s32.totalorder %s121, %s122
      %p134 = scmp.eq.s32.totalorder %s23, 3
      %p135 = por %p133, %p134
      %p137 = scmp.ne.s32.totalorder %s122, %s136
      %p138 = scmp.eq.s32.totalorder %s23, 0
      %p139 = por %p137, %p138
      %s141 = sadd.s32 %s140, 1
      %p144 = scmp.eq.s32.totalorder %s17, 3
      %p145 = scmp.ne.s32.totalorder %s140, %s142
      %p146 = scmp.eq.s32.totalorder %s17, 0
      %p147 = por %p145, %p146
      %p148 = scmp.ne.s32.totalorder %s140, %s142
      %p149 = scmp.eq.s32.totalorder %s22, 3
      %p150 = por %p148, %p149
      %p151 = scmp.ne.s32.totalorder %s142, %s143
      %p152 = scmp.eq.s32.totalorder %s22, 0
      %p153 = por %p151, %p152
      %p154 = scmp.ne.s32.totalorder %s142, %s143
      %p155 = scmp.eq.s32.totalorder %s23, 3
      %p156 = por %p154, %p155
      %p158 = scmp.ne.s32.totalorder %s143, %s157
      %p159 = scmp.eq.s32.totalorder %s23, 0
      %p160 = por %p158, %p159
      %s162 = sadd.s32 %s161, 1
      %p165 = scmp.eq.s32.totalorder %s17, 3
      %p166 = scmp.ne.s32.totalorder %s161, %s163
      %p167 = scmp.eq.s32.totalorder %s17, 0
      %p168 = por %p166, %p167
      %p169 = scmp.ne.s32.totalorder %s161, %s163
      %p170 = scmp.eq.s32.totalorder %s22, 3
      %p171 = por %p169, %p170
      %p172 = scmp.ne.s32.totalorder %s163, %s164
      %p173 = scmp.eq.s32.totalorder %s22, 0
      %p174 = por %p172, %p173
      %p175 = scmp.ne.s32.totalorder %s163, %s164
      %p176 = scmp.eq.s32.totalorder %s23, 3
      %p177 = por %p175, %p176
      %p179 = scmp.ne.s32.totalorder %s164, %s178
      %p180 = scmp.eq.s32.totalorder %s23, 0
      %p181 = por %p179, %p180
      %s183 = sadd.s32 %s182, 1
      %p186 = scmp.eq.s32.totalorder %s17, 3
      %p187 = scmp.ne.s32.totalorder %s182, %s184
      %p188 = scmp.eq.s32.totalorder %s17, 0
      %p189 = por %p187, %p188
      %p190 = scmp.ne.s32.totalorder %s182, %s184
      %p191 = scmp.eq.s32.totalorder %s22, 3
      %p192 = por %p190, %p191
      %p193 = scmp.ne.s32.totalorder %s184, %s185
      %p194 = scmp.eq.s32.totalorder %s22, 0
      %p195 = por %p193, %p194
      %p196 = scmp.ne.s32.totalorder %s184, %s185
      %p197 = scmp.eq.s32.totalorder %s23, 3
      %p198 = por %p196, %p197
      %p200 = scmp.ne.s32.totalorder %s185, %s199
      %p201 = scmp.eq.s32.totalorder %s23, 0
      %p202 = por %p200, %p201
      %s204 = sadd.s32 %s203, 1
      %p207 = scmp.eq.s32.totalorder %s17, 3
      %p208 = scmp.ne.s32.totalorder %s203, %s205
      %p209 = scmp.eq.s32.totalorder %s17, 0
      %p210 = por %p208, %p209
      %p211 = scmp.ne.s32.totalorder %s203, %s205
      %p212 = scmp.eq.s32.totalorder %s22, 3
      %p213 = por %p211, %p212
      %p214 = scmp.ne.s32.totalorder %s205, %s206
      %p215 = scmp.eq.s32.totalorder %s22, 0
      %p216 = por %p214, %p215
      %p217 = scmp.ne.s32.totalorder %s205, %s206
      %p218 = scmp.eq.s32.totalorder %s23, 3
      %p219 = por %p217, %p218
      %p221 = scmp.ne.s32.totalorder %s206, %s220
      %p222 = scmp.eq.s32.totalorder %s23, 0
      %p223 = por %p221, %p222
      %p224 = scmp.le.s32.totalorder 1, %s17
      %p225 = scmp.lt.s32.totalorder %s17, 5
      %p226 = pnand %p224, %p225
      %p227 = pneg %p226
      // Predicated region
      $region9: #{forward.1} parent=5 // pred_check
        _
      $region10: #{forward.1} parent=5 // pred_check_branch
        %229 = sbr.rel (%p226) target = $region12
      $region11: #{forward.1} parent=5 // pred_region
        %s230 = ssub.s32 %s17, 1
        // Predicated region
        $region13: #{forward.1} parent=11 // pred_check
          %p231 = pneg %p90
        $region14: #{forward.1} parent=11 // pred_check_branch
          %233 = sbr.rel (%p231) target = $region16
        $region15: #{forward.1} parent=11 // pred_region
          %s235 = ssub.s32 4096, 4096
          %236 = vsyncadd [#allocation4], %s235
          %s237 = sshll.u32 [#allocation3], 4
          %s238 = int_to_ptr.vmem [resolvable:$true] %s237
          %243 = dma.hbm_to_vmem [thread:$0]  %s2, 4096, %s238, [#allocation4], 128, 128, 8
        $region16: #{forward.1} parent=11 // pred_fallthru
          _
        // Predicated region
        $region17: #{forward.1} parent=11 // pred_check
          %p244 = pneg %p111
        $region18: #{forward.1} parent=11 // pred_check_branch
          %246 = sbr.rel (%p244) target = $region20
        $region19: #{forward.1} parent=11 // pred_region
          %s248 = ssub.s32 4096, 4096
          %249 = vsyncadd [#allocation6], %s248
          %s250 = sshll.u32 [#allocation5], 4
          %s251 = int_to_ptr.vmem [resolvable:$true] %s250
          %256 = dma.hbm_to_vmem [thread:$0]  %s3, 4096, %s251, [#allocation6], 128, 128, 8
        $region20: #{forward.1} parent=11 // pred_fallthru
          _
        // Predicated region
        $region21: #{forward.1} parent=11 // pred_check
          %p257 = pneg %p132
        $region22: #{forward.1} parent=11 // pred_check_branch
          %259 = sbr.rel (%p257) target = $region24
        $region23: #{forward.1} parent=11 // pred_region
          %s261 = ssub.s32 8192, 8192
          %262 = vsyncadd [#allocation6], %s261
          %s263 = sshll.u32 [#allocation7], 4
          %s264 = int_to_ptr.vmem [resolvable:$true] %s263
          %269 = dma.hbm_to_vmem [thread:$0]  %s4, 8192, %s264, [#allocation6], 256, 256, 16
        $region24: #{forward.1} parent=11 // pred_fallthru
          _
        // Predicated region
        $region25: #{forward.1} parent=11 // pred_check
          %p270 = pneg %p153
        $region26: #{forward.1} parent=11 // pred_check_branch
          %272 = sbr.rel (%p270) target = $region28
        $region27: #{forward.1} parent=11 // pred_region
          %s274 = ssub.s32 4096, 4096
          %275 = vsyncadd [#allocation9], %s274
          %s276 = sshll.u32 [#allocation8], 4
          %s277 = int_to_ptr.vmem [resolvable:$true] %s276
          %282 = dma.hbm_to_vmem [thread:$0]  %s5, 4096, %s277, [#allocation9], 128, 128, 8
        $region28: #{forward.1} parent=11 // pred_fallthru
          _
        // Predicated region
        $region29: #{forward.1} parent=11 // pred_check
          %p283 = pneg %p174
        $region30: #{forward.1} parent=11 // pred_check_branch
          %285 = sbr.rel (%p283) target = $region32
        $region31: #{forward.1} parent=11 // pred_region
          %s287 = ssub.s32 4096, 4096
          %288 = vsyncadd [#allocation9], %s287
          %s289 = sshll.u32 [#allocation10], 4
          %s290 = int_to_ptr.vmem [resolvable:$true] %s289
          %295 = dma.hbm_to_vmem [thread:$0]  %s6, 4096, %s290, [#allocation9], 128, 128, 8
        $region32: #{forward.1} parent=11 // pred_fallthru
          _
        // Predicated region
        $region33: #{forward.1} parent=11 // pred_check
          %p296 = pneg %p195
        $region34: #{forward.1} parent=11 // pred_check_branch
          %298 = sbr.rel (%p296) target = $region36
        $region35: #{forward.1} parent=11 // pred_region
          _
        $region36: #{forward.1} parent=11 // pred_fallthru
          _
      $region12: #{forward.1} parent=5 // pred_fallthru
        _
      %p299 = scmp.lt.s32.totalorder %s17, 4
      // Predicated region
      $region37: #{forward.1} parent=5 // pred_check
        %p300 = pneg %p299
      $region38: #{forward.1} parent=5 // pred_check_branch
        %302 = sbr.rel (%p300) target = $region40
      $region39: #{forward.1} parent=5 // pred_region
        // Predicated region
        $region41: #{forward.1} parent=39 // pred_check
          %p303 = pneg %p37
        $region42: #{forward.1} parent=39 // pred_check_branch
          %305 = sbr.rel (%p303) target = $region44
        $region43: #{forward.1} parent=39 // pred_region
          %s306 = smul.u32 2, %s17
          %p307 = scmp.lt.s32.totalorder %s306, 7
          %s308 = scalar_select %p307, %s306, 7
          %s309 = smul.addr %s308, 8
          %s310 = scalar_lea.vmem %s0, %s309
          %s311 = smul.u32 2, %s17
        $region44: #{forward.1} parent=39 // pred_fallthru
          _
        // Predicated region
        $region45: #{forward.1} parent=39 // pred_check
          %p312 = pneg %p63
        $region46: #{forward.1} parent=39 // pred_check_branch
          %314 = sbr.rel (%p312) target = $region48
        $region47: #{forward.1} parent=39 // pred_region
          %s315 = smul.u32 2, %s17
          %p316 = scmp.lt.s32.totalorder %s315, 7
          %s317 = scalar_select %p316, %s315, 7
          %s318 = scalar_lea.vmem %s1, %s317
          %s319 = smul.u32 2, %s17
        $region48: #{forward.1} parent=39 // pred_fallthru
          _
      $region40: #{forward.1} parent=5 // pred_fallthru
        _
      %p320 = scmp.le.s32.totalorder 1, %s17
      %p321 = scmp.lt.s32.totalorder %s17, 5
      %p322 = pnand %p320, %p321
      %p323 = pneg %p322
      // Predicated region
      $region49: #{forward.1} parent=5 // pred_check
        _
      $region50: #{forward.1} parent=5 // pred_check_branch
        %325 = sbr.rel (%p322) target = $region52
      $region51: #{forward.1} parent=5 // pred_region
        %s326 = ssub.s32 %s17, 1
        // Predicated region
        $region53: #{forward.1} parent=51 // pred_check
          %p327 = pneg %p90
        $region54: #{forward.1} parent=51 // pred_check_branch
          %329 = sbr.rel (%p327) target = $region56
        $region55: #{forward.1} parent=51 // pred_region
          %330 = dma.done [#allocation4], 4096
        $region56: #{forward.1} parent=51 // pred_fallthru
          _
        // Predicated region
        $region57: #{forward.1} parent=51 // pred_check
          %p331 = pneg %p111
        $region58: #{forward.1} parent=51 // pred_check_branch
          %333 = sbr.rel (%p331) target = $region60
        $region59: #{forward.1} parent=51 // pred_region
          %334 = dma.done [#allocation6], 4096
        $region60: #{forward.1} parent=51 // pred_fallthru
          _
        // Predicated region
        $region61: #{forward.1} parent=51 // pred_check
          %p335 = pneg %p132
        $region62: #{forward.1} parent=51 // pred_check_branch
          %337 = sbr.rel (%p335) target = $region64
        $region63: #{forward.1} parent=51 // pred_region
          %338 = dma.done [#allocation6], 8192
        $region64: #{forward.1} parent=51 // pred_fallthru
          _
        // Predicated region
        $region65: #{forward.1} parent=51 // pred_check
          %p339 = pneg %p153
        $region66: #{forward.1} parent=51 // pred_check_branch
          %341 = sbr.rel (%p339) target = $region68
        $region67: #{forward.1} parent=51 // pred_region
          %342 = dma.done [#allocation9], 4096
        $region68: #{forward.1} parent=51 // pred_fallthru
          _
        // Predicated region
        $region69: #{forward.1} parent=51 // pred_check
          %p343 = pneg %p174
        $region70: #{forward.1} parent=51 // pred_check_branch
          %345 = sbr.rel (%p343) target = $region72
        $region71: #{forward.1} parent=51 // pred_region
          %346 = dma.done [#allocation9], 4096
        $region72: #{forward.1} parent=51 // pred_fallthru
          _
        %s347 = smul.u32 2, %s22
        %p348 = scmp.lt.s32.totalorder %s347, 7
        %s349 = scalar_select %p348, %s347, 7
        %s350 = smul.addr %s349, 8
        %s351 = scalar_lea.vmem %s0, %s350
        %p352 = pneg %p43
        %p353 = pneg %p40
        %s354 = smul.u32 2, %s22
        %p355 = scmp.lt.s32.totalorder %s354, 7
        %s356 = scalar_select %p355, %s354, 7
        %s357 = scalar_lea.vmem %s1, %s356
        %p358 = pneg %p69
        %p359 = pneg %p66
        %p360 = pneg %p90
        %p361 = pneg %p87
        %p362 = pneg %p111
        %p363 = pneg %p108
        %p364 = pneg %p132
        %p365 = pneg %p129
        %p366 = pneg %p153
        %p367 = pneg %p150
        %p368 = pneg %p174
        %p369 = pneg %p171
        %p370 = pneg %p195
        %p371 = pneg %p192
        %p372 = pneg %p216
        %p373 = pneg %p213
        %s374 = smul.u32 2, %s22
        %p375 = scmp.lt.s32.totalorder %s374, 7
        %s376 = scalar_select %p375, %s374, 7
        %s377 = smul.addr %s376, 8
        %s378 = scalar_lea.vmem %s0, %s377
        %s379 = smul.u32 2, %s22
        %s380 = smul.u32 2, %s22
        %p381 = scmp.lt.s32.totalorder %s380, 7
        %s382 = scalar_select %p381, %s380, 7
        %s383 = scalar_lea.vmem %s1, %s382
        %s384 = smul.u32 2, %s22
        %p385 = scmp.eq.s32.totalorder %s22, 0
        // Predicated region
        $region73: #{forward.1} parent=51 // pred_check
          %p386 = pneg %p385
        $region74: #{forward.1} parent=51 // pred_check_branch
          %388 = sbr.rel (%p386) target = $region76
        $region75: #{forward.1} parent=51 // pred_region
          %vm389 = vcmask 7168
          %390 = vst.msk [vmem:[#allocation2] sm:$0xff] %vm389, 0.0
        $region76: #{forward.1} parent=51 // pred_fallthru
          _
        %v391 = vld [vmem:[%s378] sm:$0xff]
        %v392 = vld [vmem:[%s378 + $0x8] sm:$0xff]
        %v393 = vld [vmem:[#allocation3] sm:$0xff]
        %v394 = vld [vmem:[#allocation3 + $0x8] sm:$0xff]
        %v395 = vld [vmem:[#allocation3 + $0x10] sm:$0xff]
        %v396 = vld [vmem:[#allocation3 + $0x18] sm:$0xff]
        %v397 = vld [vmem:[#allocation3 + $0x20] sm:$0xff]
        %v398 = vld [vmem:[#allocation3 + $0x28] sm:$0xff]
        %v399 = vld [vmem:[#allocation3 + $0x30] sm:$0xff]
        %v400 = vld [vmem:[#allocation3 + $0x38] sm:$0xff]
        %v401 = vld [vmem:[#allocation3 + $0x40] sm:$0xff]
        %v402 = vld [vmem:[#allocation3 + $0x48] sm:$0xff]
        %v403 = vld [vmem:[#allocation3 + $0x50] sm:$0xff]
        %v404 = vld [vmem:[#allocation3 + $0x58] sm:$0xff]
        %v405 = vld [vmem:[#allocation3 + $0x60] sm:$0xff]
        %v406 = vld [vmem:[#allocation3 + $0x68] sm:$0xff]
        %v407 = vld [vmem:[#allocation3 + $0x70] sm:$0xff]
        %v408 = vld [vmem:[#allocation3 + $0x78] sm:$0xff]
        %v409 = vld [vmem:[#allocation3 + $0x80] sm:$0xff]
        %v410 = vld [vmem:[#allocation3 + $0x88] sm:$0xff]
        %v411 = vld [vmem:[#allocation3 + $0x90] sm:$0xff]
        %v412 = vld [vmem:[#allocation3 + $0x98] sm:$0xff]
        %v413 = vld [vmem:[#allocation3 + $0xa0] sm:$0xff]
        %v414 = vld [vmem:[#allocation3 + $0xa8] sm:$0xff]
        %v415 = vld [vmem:[#allocation3 + $0xb0] sm:$0xff]
        %v416 = vld [vmem:[#allocation3 + $0xb8] sm:$0xff]
        %v417 = vld [vmem:[#allocation3 + $0xc0] sm:$0xff]
        %v418 = vld [vmem:[#allocation3 + $0xc8] sm:$0xff]
        %v419 = vld [vmem:[#allocation3 + $0xd0] sm:$0xff]
        %v420 = vld [vmem:[#allocation3 + $0xd8] sm:$0xff]
        %v421 = vld [vmem:[#allocation3 + $0xe0] sm:$0xff]
        %v422 = vld [vmem:[#allocation3 + $0xe8] sm:$0xff]
        %v423 = vld [vmem:[#allocation3 + $0xf0] sm:$0xff]
        %v424 = vld [vmem:[#allocation3 + $0xf8] sm:$0xff]
        %v425 = vld [vmem:[#allocation5] sm:$0xff]
        %v426 = vld [vmem:[#allocation5 + $0x8] sm:$0xff]
        %v427 = vld [vmem:[#allocation5 + $0x10] sm:$0xff]
        %v428 = vld [vmem:[#allocation5 + $0x18] sm:$0xff]
        %v429 = vld [vmem:[#allocation5 + $0x20] sm:$0xff]
        %v430 = vld [vmem:[#allocation5 + $0x28] sm:$0xff]
        %v431 = vld [vmem:[#allocation5 + $0x30] sm:$0xff]
        %v432 = vld [vmem:[#allocation5 + $0x38] sm:$0xff]
        %v433 = vld [vmem:[#allocation5 + $0x40] sm:$0xff]
        %v434 = vld [vmem:[#allocation5 + $0x48] sm:$0xff]
        %v435 = vld [vmem:[#allocation5 + $0x50] sm:$0xff]
        %v436 = vld [vmem:[#allocation5 + $0x58] sm:$0xff]
        %v437 = vld [vmem:[#allocation5 + $0x60] sm:$0xff]
        %v438 = vld [vmem:[#allocation5 + $0x68] sm:$0xff]
        %v439 = vld [vmem:[#allocation5 + $0x70] sm:$0xff]
        %v440 = vld [vmem:[#allocation5 + $0x78] sm:$0xff]
        %v441 = vld [vmem:[#allocation5 + $0x80] sm:$0xff]
        %v442 = vld [vmem:[#allocation5 + $0x88] sm:$0xff]
        %v443 = vld [vmem:[#allocation5 + $0x90] sm:$0xff]
        %v444 = vld [vmem:[#allocation5 + $0x98] sm:$0xff]
        %v445 = vld [vmem:[#allocation5 + $0xa0] sm:$0xff]
        %v446 = vld [vmem:[#allocation5 + $0xa8] sm:$0xff]
        %v447 = vld [vmem:[#allocation5 + $0xb0] sm:$0xff]
        %v448 = vld [vmem:[#allocation5 + $0xb8] sm:$0xff]
        %v449 = vld [vmem:[#allocation5 + $0xc0] sm:$0xff]
        %v450 = vld [vmem:[#allocation5 + $0xc8] sm:$0xff]
        %v451 = vld [vmem:[#allocation5 + $0xd0] sm:$0xff]
        %v452 = vld [vmem:[#allocation5 + $0xd8] sm:$0xff]
        %v453 = vld [vmem:[#allocation5 + $0xe0] sm:$0xff]
        %v454 = vld [vmem:[#allocation5 + $0xe8] sm:$0xff]
        %v455 = vld [vmem:[#allocation5 + $0xf0] sm:$0xff]
        %v456 = vld [vmem:[#allocation5 + $0xf8] sm:$0xff]
        %v459 = vcombine.low %v391, %v392
        %v460 = vcombine.high %v391, %v392
        %v462 = vunpack.c.l.s4 1966171168
        %v463 = vunpack.c.0.s8 %v462
        %v464 = vlaneseq
        %v465 = vshrl.u32 %v464, 7
        %v466 = vsub.s32 %v463, %v465
        %v467 = vrot.slane %v459, %v466
        %v469 = vunpack.c.l.s4 1966171168
        %v470 = vunpack.c.0.s8 %v469
        %v471 = vlaneseq
        %v472 = vshrl.u32 %v471, 7
        %v473 = vsub.s32 %v470, %v472
        %v474 = vrot.slane %v460, %v473
        %v475 = vcombine.high %v467, %v467
        %v476 = vcombine.high %v474, %v474
        %v478 = vunpack.c.l.s4 1966171168
        %v479 = vunpack.c.0.s8 %v478
        %v480 = vlaneseq
        %v481 = vshrl.u32 %v480, 7
        %v482 = vsub.s32 %v479, %v481
        %v483 = vrot.slane %v467, %v482
        %v485 = vunpack.c.l.s4 1966171168
        %v486 = vunpack.c.0.s8 %v485
        %v487 = vlaneseq
        %v488 = vshrl.u32 %v487, 7
        %v489 = vsub.s32 %v486, %v488
        %v490 = vrot.slane %v474, %v489
        %v492 = vunpack.c.l.s4 1966171168
        %v493 = vunpack.c.0.s8 %v492
        %v494 = vlaneseq
        %v495 = vshrl.u32 %v494, 7
        %v496 = vsub.s32 %v493, %v495
        %v497 = vrot.slane %v475, %v496
        %v499 = vunpack.c.l.s4 1966171168
        %v500 = vunpack.c.0.s8 %v499
        %v501 = vlaneseq
        %v502 = vshrl.u32 %v501, 7
        %v503 = vsub.s32 %v500, %v502
        %v504 = vrot.slane %v476, %v503
        %v505 = vcombine.high %v483, %v483
        %v506 = vcombine.high %v490, %v490
        %v507 = vcombine.high %v497, %v497
        %v508 = vcombine.high %v504, %v504
        %510 = vset.pattern.permute.xlu0 0
        %511 = vperm.xlu0 %510, %v393
        %v512 = vpop.permute.xlu0 %511
        %515 = vset.pattern.permute.xlu0 0
        %516 = vperm.xlu0 %515, %v394
        %v517 = vpop.permute.xlu0 %516
        %520 = vset.pattern.permute.xlu0 0
        %521 = vperm.xlu0 %520, %v395
        %v522 = vpop.permute.xlu0 %521
        %525 = vset.pattern.permute.xlu0 0
        %526 = vperm.xlu0 %525, %v396
        %v527 = vpop.permute.xlu0 %526
        %530 = vset.pattern.permute.xlu0 0
        %531 = vperm.xlu0 %530, %v397
        %v532 = vpop.permute.xlu0 %531
        %535 = vset.pattern.permute.xlu0 0
        %536 = vperm.xlu0 %535, %v398
        %v537 = vpop.permute.xlu0 %536
        %540 = vset.pattern.permute.xlu0 0
        %541 = vperm.xlu0 %540, %v399
        %v542 = vpop.permute.xlu0 %541
        %545 = vset.pattern.permute.xlu0 0
        %546 = vperm.xlu0 %545, %v400
        %v547 = vpop.permute.xlu0 %546
        %550 = vset.pattern.permute.xlu0 0
        %551 = vperm.xlu0 %550, %v401
        %v552 = vpop.permute.xlu0 %551
        %555 = vset.pattern.permute.xlu0 0
        %556 = vperm.xlu0 %555, %v402
        %v557 = vpop.permute.xlu0 %556
        %560 = vset.pattern.permute.xlu0 0
        %561 = vperm.xlu0 %560, %v403
        %v562 = vpop.permute.xlu0 %561
        %565 = vset.pattern.permute.xlu0 0
        %566 = vperm.xlu0 %565, %v404
        %v567 = vpop.permute.xlu0 %566
        %570 = vset.pattern.permute.xlu0 0
        %571 = vperm.xlu0 %570, %v405
        %v572 = vpop.permute.xlu0 %571
        %575 = vset.pattern.permute.xlu0 0
        %576 = vperm.xlu0 %575, %v406
        %v577 = vpop.permute.xlu0 %576
        %580 = vset.pattern.permute.xlu0 0
        %581 = vperm.xlu0 %580, %v407
        %v582 = vpop.permute.xlu0 %581
        %585 = vset.pattern.permute.xlu0 0
        %586 = vperm.xlu0 %585, %v408
        %v587 = vpop.permute.xlu0 %586
        %590 = vset.pattern.permute.xlu0 0
        %591 = vperm.xlu0 %590, %v409
        %v592 = vpop.permute.xlu0 %591
        %595 = vset.pattern.permute.xlu0 0
        %596 = vperm.xlu0 %595, %v410
        %v597 = vpop.permute.xlu0 %596
        %600 = vset.pattern.permute.xlu0 0
        %601 = vperm.xlu0 %600, %v411
        %v602 = vpop.permute.xlu0 %601
        %605 = vset.pattern.permute.xlu0 0
        %606 = vperm.xlu0 %605, %v412
        %v607 = vpop.permute.xlu0 %606
        %610 = vset.pattern.permute.xlu0 0
        %611 = vperm.xlu0 %610, %v413
        %v612 = vpop.permute.xlu0 %611
        %615 = vset.pattern.permute.xlu0 0
        %616 = vperm.xlu0 %615, %v414
        %v617 = vpop.permute.xlu0 %616
        %620 = vset.pattern.permute.xlu0 0
        %621 = vperm.xlu0 %620, %v415
        %v622 = vpop.permute.xlu0 %621
        %625 = vset.pattern.permute.xlu0 0
        %626 = vperm.xlu0 %625, %v416
        %v627 = vpop.permute.xlu0 %626
        %630 = vset.pattern.permute.xlu0 0
        %631 = vperm.xlu0 %630, %v417
        %v632 = vpop.permute.xlu0 %631
        %635 = vset.pattern.permute.xlu0 0
        %636 = vperm.xlu0 %635, %v418
        %v637 = vpop.permute.xlu0 %636
        %640 = vset.pattern.permute.xlu0 0
        %641 = vperm.xlu0 %640, %v419
        %v642 = vpop.permute.xlu0 %641
        %645 = vset.pattern.permute.xlu0 0
        %646 = vperm.xlu0 %645, %v420
        %v647 = vpop.permute.xlu0 %646
        %650 = vset.pattern.permute.xlu0 0
        %651 = vperm.xlu0 %650, %v421
        %v652 = vpop.permute.xlu0 %651
        %655 = vset.pattern.permute.xlu0 0
        %656 = vperm.xlu0 %655, %v422
        %v657 = vpop.permute.xlu0 %656
        %660 = vset.pattern.permute.xlu0 0
        %661 = vperm.xlu0 %660, %v423
        %v662 = vpop.permute.xlu0 %661
        %665 = vset.pattern.permute.xlu0 0
        %666 = vperm.xlu0 %665, %v424
        %v667 = vpop.permute.xlu0 %666
        %v669 = vlaneseq
        %v670 = vshrl.u32 %v669, 7
        %v671 = vsub.s32 0, %v670
        %v672 = vrot.slane %v483, %v671
        %v673 = vlaneseq
        %v674 = vshrl.u32 %v673, 7
        %v675 = vsub.s32 1, %v674
        %v676 = vrot.slane %v483, %v675
        %v677 = vlaneseq
        %v678 = vshrl.u32 %v677, 7
        %v679 = vsub.s32 0, %v678
        %v680 = vrot.slane %v497, %v679
        %v681 = vlaneseq
        %v682 = vshrl.u32 %v681, 7
        %v683 = vsub.s32 1, %v682
        %v684 = vrot.slane %v497, %v683
        %v685 = vlaneseq
        %v686 = vshrl.u32 %v685, 7
        %v687 = vsub.s32 0, %v686
        %v688 = vrot.slane %v505, %v687
        %v689 = vlaneseq
        %v690 = vshrl.u32 %v689, 7
        %v691 = vsub.s32 1, %v690
        %v692 = vrot.slane %v505, %v691
        %v693 = vlaneseq
        %v694 = vshrl.u32 %v693, 7
        %v695 = vsub.s32 0, %v694
        %v696 = vrot.slane %v507, %v695
        %v697 = vlaneseq
        %v698 = vshrl.u32 %v697, 7
        %v699 = vsub.s32 1, %v698
        %v700 = vrot.slane %v507, %v699
        %v701 = vlaneseq
        %v702 = vshrl.u32 %v701, 7
        %v703 = vsub.s32 0, %v702
        %v704 = vrot.slane %v490, %v703
        %v705 = vlaneseq
        %v706 = vshrl.u32 %v705, 7
        %v707 = vsub.s32 1, %v706
        %v708 = vrot.slane %v490, %v707
        %v709 = vlaneseq
        %v710 = vshrl.u32 %v709, 7
        %v711 = vsub.s32 0, %v710
        %v712 = vrot.slane %v504, %v711
        %v713 = vlaneseq
        %v714 = vshrl.u32 %v713, 7
        %v715 = vsub.s32 1, %v714
        %v716 = vrot.slane %v504, %v715
        %v717 = vlaneseq
        %v718 = vshrl.u32 %v717, 7
        %v719 = vsub.s32 0, %v718
        %v720 = vrot.slane %v506, %v719
        %v721 = vlaneseq
        %v722 = vshrl.u32 %v721, 7
        %v723 = vsub.s32 1, %v722
        %v724 = vrot.slane %v506, %v723
        %v725 = vlaneseq
        %v726 = vshrl.u32 %v725, 7
        %v727 = vsub.s32 0, %v726
        %v728 = vrot.slane %v508, %v727
        %v729 = vlaneseq
        %v730 = vshrl.u32 %v729, 7
        %v731 = vsub.s32 1, %v730
        %v732 = vrot.slane %v508, %v731
        %v749 = vmul.f32 %v512, %v672
        %v750 = vmul.f32 %v512, %v676
        %v751 = vmul.f32 %v517, %v672
        %v752 = vmul.f32 %v517, %v676
        %v753 = vmul.f32 %v522, %v672
        %v754 = vmul.f32 %v522, %v676
        %v755 = vmul.f32 %v527, %v672
        %v756 = vmul.f32 %v527, %v676
        %v757 = vmul.f32 %v532, %v680
        %v758 = vmul.f32 %v532, %v684
        %v759 = vmul.f32 %v537, %v680
        %v760 = vmul.f32 %v537, %v684
        %v761 = vmul.f32 %v542, %v680
        %v762 = vmul.f32 %v542, %v684
        %v763 = vmul.f32 %v547, %v680
        %v764 = vmul.f32 %v547, %v684
        %v765 = vmul.f32 %v552, %v688
        %v766 = vmul.f32 %v552, %v692
        %v767 = vmul.f32 %v557, %v688
        %v768 = vmul.f32 %v557, %v692
        %v769 = vmul.f32 %v562, %v688
        %v770 = vmul.f32 %v562, %v692
        %v771 = vmul.f32 %v567, %v688
        %v772 = vmul.f32 %v567, %v692
        %v773 = vmul.f32 %v572, %v696
        %v774 = vmul.f32 %v572, %v700
        %v775 = vmul.f32 %v577, %v696
        %v776 = vmul.f32 %v577, %v700
        %v777 = vmul.f32 %v582, %v696
        %v778 = vmul.f32 %v582, %v700
        %v779 = vmul.f32 %v587, %v696
        %v780 = vmul.f32 %v587, %v700
        %v781 = vmul.f32 %v592, %v704
        %v782 = vmul.f32 %v592, %v708
        %v783 = vmul.f32 %v597, %v704
        %v784 = vmul.f32 %v597, %v708
        %v785 = vmul.f32 %v602, %v704
        %v786 = vmul.f32 %v602, %v708
        %v787 = vmul.f32 %v607, %v704
        %v788 = vmul.f32 %v607, %v708
        %v789 = vmul.f32 %v612, %v712
        %v790 = vmul.f32 %v612, %v716
        %v791 = vmul.f32 %v617, %v712
        %v792 = vmul.f32 %v617, %v716
        %v793 = vmul.f32 %v622, %v712
        %v794 = vmul.f32 %v622, %v716
        %v795 = vmul.f32 %v627, %v712
        %v796 = vmul.f32 %v627, %v716
        %v797 = vmul.f32 %v632, %v720
        %v798 = vmul.f32 %v632, %v724
        %v799 = vmul.f32 %v637, %v720
        %v800 = vmul.f32 %v637, %v724
        %v801 = vmul.f32 %v642, %v720
        %v802 = vmul.f32 %v642, %v724
        %v803 = vmul.f32 %v647, %v720
        %v804 = vmul.f32 %v647, %v724
        %v805 = vmul.f32 %v652, %v728
        %v806 = vmul.f32 %v652, %v732
        %v807 = vmul.f32 %v657, %v728
        %v808 = vmul.f32 %v657, %v732
        %v809 = vmul.f32 %v662, %v728
        %v810 = vmul.f32 %v662, %v732
        %v811 = vmul.f32 %v667, %v728
        %v812 = vmul.f32 %v667, %v732
        %814 = vset.pattern.permute.xlu0 0
        %815 = vperm.xlu0 %814, %v425
        %v816 = vpop.permute.xlu0 %815
        %819 = vset.pattern.permute.xlu0 0
        %820 = vperm.xlu0 %819, %v426
        %v821 = vpop.permute.xlu0 %820
        %824 = vset.pattern.permute.xlu0 0
        %825 = vperm.xlu0 %824, %v427
        %v826 = vpop.permute.xlu0 %825
        %829 = vset.pattern.permute.xlu0 0
        %830 = vperm.xlu0 %829, %v428
        %v831 = vpop.permute.xlu0 %830
        %834 = vset.pattern.permute.xlu0 0
        %835 = vperm.xlu0 %834, %v429
        %v836 = vpop.permute.xlu0 %835
        %839 = vset.pattern.permute.xlu0 0
        %840 = vperm.xlu0 %839, %v430
        %v841 = vpop.permute.xlu0 %840
        %844 = vset.pattern.permute.xlu0 0
        %845 = vperm.xlu0 %844, %v431
        %v846 = vpop.permute.xlu0 %845
        %849 = vset.pattern.permute.xlu0 0
        %850 = vperm.xlu0 %849, %v432
        %v851 = vpop.permute.xlu0 %850
        %854 = vset.pattern.permute.xlu0 0
        %855 = vperm.xlu0 %854, %v433
        %v856 = vpop.permute.xlu0 %855
        %859 = vset.pattern.permute.xlu0 0
        %860 = vperm.xlu0 %859, %v434
        %v861 = vpop.permute.xlu0 %860
        %864 = vset.pattern.permute.xlu0 0
        %865 = vperm.xlu0 %864, %v435
        %v866 = vpop.permute.xlu0 %865
        %869 = vset.pattern.permute.xlu0 0
        %870 = vperm.xlu0 %869, %v436
        %v871 = vpop.permute.xlu0 %870
        %874 = vset.pattern.permute.xlu0 0
        %875 = vperm.xlu0 %874, %v437
        %v876 = vpop.permute.xlu0 %875
        %879 = vset.pattern.permute.xlu0 0
        %880 = vperm.xlu0 %879, %v438
        %v881 = vpop.permute.xlu0 %880
        %884 = vset.pattern.permute.xlu0 0
        %885 = vperm.xlu0 %884, %v439
        %v886 = vpop.permute.xlu0 %885
        %889 = vset.pattern.permute.xlu0 0
        %890 = vperm.xlu0 %889, %v440
        %v891 = vpop.permute.xlu0 %890
        %894 = vset.pattern.permute.xlu0 0
        %895 = vperm.xlu0 %894, %v441
        %v896 = vpop.permute.xlu0 %895
        %899 = vset.pattern.permute.xlu0 0
        %900 = vperm.xlu0 %899, %v442
        %v901 = vpop.permute.xlu0 %900
        %904 = vset.pattern.permute.xlu0 0
        %905 = vperm.xlu0 %904, %v443
        %v906 = vpop.permute.xlu0 %905
        %909 = vset.pattern.permute.xlu0 0
        %910 = vperm.xlu0 %909, %v444
        %v911 = vpop.permute.xlu0 %910
        %914 = vset.pattern.permute.xlu0 0
        %915 = vperm.xlu0 %914, %v445
        %v916 = vpop.permute.xlu0 %915
        %919 = vset.pattern.permute.xlu0 0
        %920 = vperm.xlu0 %919, %v446
        %v921 = vpop.permute.xlu0 %920
        %924 = vset.pattern.permute.xlu0 0
        %925 = vperm.xlu0 %924, %v447
        %v926 = vpop.permute.xlu0 %925
        %929 = vset.pattern.permute.xlu0 0
        %930 = vperm.xlu0 %929, %v448
        %v931 = vpop.permute.xlu0 %930
        %934 = vset.pattern.permute.xlu0 0
        %935 = vperm.xlu0 %934, %v449
        %v936 = vpop.permute.xlu0 %935
        %939 = vset.pattern.permute.xlu0 0
        %940 = vperm.xlu0 %939, %v450
        %v941 = vpop.permute.xlu0 %940
        %944 = vset.pattern.permute.xlu0 0
        %945 = vperm.xlu0 %944, %v451
        %v946 = vpop.permute.xlu0 %945
        %949 = vset.pattern.permute.xlu0 0
        %950 = vperm.xlu0 %949, %v452
        %v951 = vpop.permute.xlu0 %950
        %954 = vset.pattern.permute.xlu0 0
        %955 = vperm.xlu0 %954, %v453
        %v956 = vpop.permute.xlu0 %955
        %959 = vset.pattern.permute.xlu0 0
        %960 = vperm.xlu0 %959, %v454
        %v961 = vpop.permute.xlu0 %960
        %964 = vset.pattern.permute.xlu0 0
        %965 = vperm.xlu0 %964, %v455
        %v966 = vpop.permute.xlu0 %965
        %969 = vset.pattern.permute.xlu0 0
        %970 = vperm.xlu0 %969, %v456
        %v971 = vpop.permute.xlu0 %970
        %v973 = vadd.f32 %v749, %v816
        %v974 = vadd.f32 %v750, %v816
        %v975 = vadd.f32 %v751, %v821
        %v976 = vadd.f32 %v752, %v821
        %v977 = vadd.f32 %v753, %v826
        %v978 = vadd.f32 %v754, %v826
        %v979 = vadd.f32 %v755, %v831
        %v980 = vadd.f32 %v756, %v831
        %v981 = vadd.f32 %v757, %v836
        %v982 = vadd.f32 %v758, %v836
        %v983 = vadd.f32 %v759, %v841
        %v984 = vadd.f32 %v760, %v841
        %v985 = vadd.f32 %v761, %v846
        %v986 = vadd.f32 %v762, %v846
        %v987 = vadd.f32 %v763, %v851
        %v988 = vadd.f32 %v764, %v851
        %v989 = vadd.f32 %v765, %v856
        %v990 = vadd.f32 %v766, %v856
        %v991 = vadd.f32 %v767, %v861
        %v992 = vadd.f32 %v768, %v861
        %v993 = vadd.f32 %v769, %v866
        %v994 = vadd.f32 %v770, %v866
        %v995 = vadd.f32 %v771, %v871
        %v996 = vadd.f32 %v772, %v871
        %v997 = vadd.f32 %v773, %v876
        %v998 = vadd.f32 %v774, %v876
        %v999 = vadd.f32 %v775, %v881
        %v1000 = vadd.f32 %v776, %v881
        %v1001 = vadd.f32 %v777, %v886
        %v1002 = vadd.f32 %v778, %v886
        %v1003 = vadd.f32 %v779, %v891
        %v1004 = vadd.f32 %v780, %v891
        %v1005 = vadd.f32 %v781, %v896
        %v1006 = vadd.f32 %v782, %v896
        %v1007 = vadd.f32 %v783, %v901
        %v1008 = vadd.f32 %v784, %v901
        %v1009 = vadd.f32 %v785, %v906
        %v1010 = vadd.f32 %v786, %v906
        %v1011 = vadd.f32 %v787, %v911
        %v1012 = vadd.f32 %v788, %v911
        %v1013 = vadd.f32 %v789, %v916
        %v1014 = vadd.f32 %v790, %v916
        %v1015 = vadd.f32 %v791, %v921
        %v1016 = vadd.f32 %v792, %v921
        %v1017 = vadd.f32 %v793, %v926
        %v1018 = vadd.f32 %v794, %v926
        %v1019 = vadd.f32 %v795, %v931
        %v1020 = vadd.f32 %v796, %v931
        %v1021 = vadd.f32 %v797, %v936
        %v1022 = vadd.f32 %v798, %v936
        %v1023 = vadd.f32 %v799, %v941
        %v1024 = vadd.f32 %v800, %v941
        %v1025 = vadd.f32 %v801, %v946
        %v1026 = vadd.f32 %v802, %v946
        %v1027 = vadd.f32 %v803, %v951
        %v1028 = vadd.f32 %v804, %v951
        %v1029 = vadd.f32 %v805, %v956
        %v1030 = vadd.f32 %v806, %v956
        %v1031 = vadd.f32 %v807, %v961
        %v1032 = vadd.f32 %v808, %v961
        %v1033 = vadd.f32 %v809, %v966
        %v1034 = vadd.f32 %v810, %v966
        %v1035 = vadd.f32 %v811, %v971
        %v1036 = vadd.f32 %v812, %v971
        %v1037 = vtanh.pop %v973
        %v1038 = vtanh.pop %v974
        %v1039 = vtanh.pop %v975
        %v1040 = vtanh.pop %v976
        %v1041 = vtanh.pop %v977
        %v1042 = vtanh.pop %v978
        %v1043 = vtanh.pop %v979
        %v1044 = vtanh.pop %v980
        %v1045 = vtanh.pop %v981
        %v1046 = vtanh.pop %v982
        %v1047 = vtanh.pop %v983
        %v1048 = vtanh.pop %v984
        %v1049 = vtanh.pop %v985
        %v1050 = vtanh.pop %v986
        %v1051 = vtanh.pop %v987
        %v1052 = vtanh.pop %v988
        %v1053 = vtanh.pop %v989
        %v1054 = vtanh.pop %v990
        %v1055 = vtanh.pop %v991
        %v1056 = vtanh.pop %v992
        %v1057 = vtanh.pop %v993
        %v1058 = vtanh.pop %v994
        %v1059 = vtanh.pop %v995
        %v1060 = vtanh.pop %v996
        %v1061 = vtanh.pop %v997
        %v1062 = vtanh.pop %v998
        %v1063 = vtanh.pop %v999
        %v1064 = vtanh.pop %v1000
        %v1065 = vtanh.pop %v1001
        %v1066 = vtanh.pop %v1002
        %v1067 = vtanh.pop %v1003
        %v1068 = vtanh.pop %v1004
        %v1069 = vtanh.pop %v1005
        %v1070 = vtanh.pop %v1006
        %v1071 = vtanh.pop %v1007
        %v1072 = vtanh.pop %v1008
        %v1073 = vtanh.pop %v1009
        %v1074 = vtanh.pop %v1010
        %v1075 = vtanh.pop %v1011
        %v1076 = vtanh.pop %v1012
        %v1077 = vtanh.pop %v1013
        %v1078 = vtanh.pop %v1014
        %v1079 = vtanh.pop %v1015
        %v1080 = vtanh.pop %v1016
        %v1081 = vtanh.pop %v1017
        %v1082 = vtanh.pop %v1018
        %v1083 = vtanh.pop %v1019
        %v1084 = vtanh.pop %v1020
        %v1085 = vtanh.pop %v1021
        %v1086 = vtanh.pop %v1022
        %v1087 = vtanh.pop %v1023
        %v1088 = vtanh.pop %v1024
        %v1089 = vtanh.pop %v1025
        %v1090 = vtanh.pop %v1026
        %v1091 = vtanh.pop %v1027
        %v1092 = vtanh.pop %v1028
        %v1093 = vtanh.pop %v1029
        %v1094 = vtanh.pop %v1030
        %v1095 = vtanh.pop %v1031
        %v1096 = vtanh.pop %v1032
        %v1097 = vtanh.pop %v1033
        %v1098 = vtanh.pop %v1034
        %v1099 = vtanh.pop %v1035
        %v1100 = vtanh.pop %v1036
        %v1101 = vld [vmem:[#allocation7] sm:$0xff]
        %v1102 = vld [vmem:[#allocation7 + $0x8] sm:$0xff]
        %v1103 = vld [vmem:[#allocation7 + $0x10] sm:$0xff]
        %v1104 = vld [vmem:[#allocation7 + $0x18] sm:$0xff]
        %v1105 = vld [vmem:[#allocation7 + $0x20] sm:$0xff]
        %v1106 = vld [vmem:[#allocation7 + $0x28] sm:$0xff]
        %v1107 = vld [vmem:[#allocation7 + $0x30] sm:$0xff]
        %v1108 = vld [vmem:[#allocation7 + $0x38] sm:$0xff]
        %v1109 = vld [vmem:[#allocation7 + $0x40] sm:$0xff]
        %v1110 = vld [vmem:[#allocation7 + $0x48] sm:$0xff]
        %v1111 = vld [vmem:[#allocation7 + $0x50] sm:$0xff]
        %v1112 = vld [vmem:[#allocation7 + $0x58] sm:$0xff]
        %v1113 = vld [vmem:[#allocation7 + $0x60] sm:$0xff]
        %v1114 = vld [vmem:[#allocation7 + $0x68] sm:$0xff]
        %v1115 = vld [vmem:[#allocation7 + $0x70] sm:$0xff]
        %v1116 = vld [vmem:[#allocation7 + $0x78] sm:$0xff]
        %v1117 = vld [vmem:[#allocation7 + $0x80] sm:$0xff]
        %v1118 = vld [vmem:[#allocation7 + $0x88] sm:$0xff]
        %v1119 = vld [vmem:[#allocation7 + $0x90] sm:$0xff]
        %v1120 = vld [vmem:[#allocation7 + $0x98] sm:$0xff]
        %v1121 = vld [vmem:[#allocation7 + $0xa0] sm:$0xff]
        %v1122 = vld [vmem:[#allocation7 + $0xa8] sm:$0xff]
        %v1123 = vld [vmem:[#allocation7 + $0xb0] sm:$0xff]
        %v1124 = vld [vmem:[#allocation7 + $0xb8] sm:$0xff]
        %v1125 = vld [vmem:[#allocation7 + $0xc0] sm:$0xff]
        %v1126 = vld [vmem:[#allocation7 + $0xc8] sm:$0xff]
        %v1127 = vld [vmem:[#allocation7 + $0xd0] sm:$0xff]
        %v1128 = vld [vmem:[#allocation7 + $0xd8] sm:$0xff]
        %v1129 = vld [vmem:[#allocation7 + $0xe0] sm:$0xff]
        %v1130 = vld [vmem:[#allocation7 + $0xe8] sm:$0xff]
        %v1131 = vld [vmem:[#allocation7 + $0xf0] sm:$0xff]
        %v1132 = vld [vmem:[#allocation7 + $0xf8] sm:$0xff]
        %v1133 = vld [vmem:[#allocation7 + $0x100] sm:$0xff]
        %v1134 = vld [vmem:[#allocation7 + $0x108] sm:$0xff]
        %v1135 = vld [vmem:[#allocation7 + $0x110] sm:$0xff]
        %v1136 = vld [vmem:[#allocation7 + $0x118] sm:$0xff]
        %v1137 = vld [vmem:[#allocation7 + $0x120] sm:$0xff]
        %v1138 = vld [vmem:[#allocation7 + $0x128] sm:$0xff]
        %v1139 = vld [vmem:[#allocation7 + $0x130] sm:$0xff]
        %v1140 = vld [vmem:[#allocation7 + $0x138] sm:$0xff]
        %v1141 = vld [vmem:[#allocation7 + $0x140] sm:$0xff]
        %v1142 = vld [vmem:[#allocation7 + $0x148] sm:$0xff]
        %v1143 = vld [vmem:[#allocation7 + $0x150] sm:$0xff]
        %v1144 = vld [vmem:[#allocation7 + $0x158] sm:$0xff]
        %v1145 = vld [vmem:[#allocation7 + $0x160] sm:$0xff]
        %v1146 = vld [vmem:[#allocation7 + $0x168] sm:$0xff]
        %v1147 = vld [vmem:[#allocation7 + $0x170] sm:$0xff]
        %v1148 = vld [vmem:[#allocation7 + $0x178] sm:$0xff]
        %v1149 = vld [vmem:[#allocation7 + $0x180] sm:$0xff]
        %v1150 = vld [vmem:[#allocation7 + $0x188] sm:$0xff]
        %v1151 = vld [vmem:[#allocation7 + $0x190] sm:$0xff]
        %v1152 = vld [vmem:[#allocation7 + $0x198] sm:$0xff]
        %v1153 = vld [vmem:[#allocation7 + $0x1a0] sm:$0xff]
        %v1154 = vld [vmem:[#allocation7 + $0x1a8] sm:$0xff]
        %v1155 = vld [vmem:[#allocation7 + $0x1b0] sm:$0xff]
        %v1156 = vld [vmem:[#allocation7 + $0x1b8] sm:$0xff]
        %v1157 = vld [vmem:[#allocation7 + $0x1c0] sm:$0xff]
        %v1158 = vld [vmem:[#allocation7 + $0x1c8] sm:$0xff]
        %v1159 = vld [vmem:[#allocation7 + $0x1d0] sm:$0xff]
        %v1160 = vld [vmem:[#allocation7 + $0x1d8] sm:$0xff]
        %v1161 = vld [vmem:[#allocation7 + $0x1e0] sm:$0xff]
        %v1162 = vld [vmem:[#allocation7 + $0x1e8] sm:$0xff]
        %v1163 = vld [vmem:[#allocation7 + $0x1f0] sm:$0xff]
        %v1164 = vld [vmem:[#allocation7 + $0x1f8] sm:$0xff]
        %v1165 = vld [vmem:[#allocation8] sm:$0xff]
        %v1166 = vld [vmem:[#allocation8 + $0x8] sm:$0xff]
        %v1167 = vld [vmem:[#allocation8 + $0x10] sm:$0xff]
        %v1168 = vld [vmem:[#allocation8 + $0x18] sm:$0xff]
        %v1169 = vld [vmem:[#allocation8 + $0x20] sm:$0xff]
        %v1170 = vld [vmem:[#allocation8 + $0x28] sm:$0xff]
        %v1171 = vld [vmem:[#allocation8 + $0x30] sm:$0xff]
        %v1172 = vld [vmem:[#allocation8 + $0x38] sm:$0xff]
        %v1173 = vld [vmem:[#allocation8 + $0x40] sm:$0xff]
        %v1174 = vld [vmem:[#allocation8 + $0x48] sm:$0xff]
        %v1175 = vld [vmem:[#allocation8 + $0x50] sm:$0xff]
        %v1176 = vld [vmem:[#allocation8 + $0x58] sm:$0xff]
        %v1177 = vld [vmem:[#allocation8 + $0x60] sm:$0xff]
        %v1178 = vld [vmem:[#allocation8 + $0x68] sm:$0xff]
        %v1179 = vld [vmem:[#allocation8 + $0x70] sm:$0xff]
        %v1180 = vld [vmem:[#allocation8 + $0x78] sm:$0xff]
        %v1181 = vld [vmem:[#allocation8 + $0x80] sm:$0xff]
        %v1182 = vld [vmem:[#allocation8 + $0x88] sm:$0xff]
        %v1183 = vld [vmem:[#allocation8 + $0x90] sm:$0xff]
        %v1184 = vld [vmem:[#allocation8 + $0x98] sm:$0xff]
        %v1185 = vld [vmem:[#allocation8 + $0xa0] sm:$0xff]
        %v1186 = vld [vmem:[#allocation8 + $0xa8] sm:$0xff]
        %v1187 = vld [vmem:[#allocation8 + $0xb0] sm:$0xff]
        %v1188 = vld [vmem:[#allocation8 + $0xb8] sm:$0xff]
        %v1189 = vld [vmem:[#allocation8 + $0xc0] sm:$0xff]
        %v1190 = vld [vmem:[#allocation8 + $0xc8] sm:$0xff]
        %v1191 = vld [vmem:[#allocation8 + $0xd0] sm:$0xff]
        %v1192 = vld [vmem:[#allocation8 + $0xd8] sm:$0xff]
        %v1193 = vld [vmem:[#allocation8 + $0xe0] sm:$0xff]
        %v1194 = vld [vmem:[#allocation8 + $0xe8] sm:$0xff]
        %v1195 = vld [vmem:[#allocation8 + $0xf0] sm:$0xff]
        %v1196 = vld [vmem:[#allocation8 + $0xf8] sm:$0xff]
        %1198 = vset.pattern.permute.xlu0 0
        %1199 = vperm.xlu0 %1198, %v1165
        %v1200 = vpop.permute.xlu0 %1199
        %1203 = vset.pattern.permute.xlu0 0
        %1204 = vperm.xlu0 %1203, %v1166
        %v1205 = vpop.permute.xlu0 %1204
        %1208 = vset.pattern.permute.xlu0 0
        %1209 = vperm.xlu0 %1208, %v1167
        %v1210 = vpop.permute.xlu0 %1209
        %1213 = vset.pattern.permute.xlu0 0
        %1214 = vperm.xlu0 %1213, %v1168
        %v1215 = vpop.permute.xlu0 %1214
        %1218 = vset.pattern.permute.xlu0 0
        %1219 = vperm.xlu0 %1218, %v1169
        %v1220 = vpop.permute.xlu0 %1219
        %1223 = vset.pattern.permute.xlu0 0
        %1224 = vperm.xlu0 %1223, %v1170
        %v1225 = vpop.permute.xlu0 %1224
        %1228 = vset.pattern.permute.xlu0 0
        %1229 = vperm.xlu0 %1228, %v1171
        %v1230 = vpop.permute.xlu0 %1229
        %1233 = vset.pattern.permute.xlu0 0
        %1234 = vperm.xlu0 %1233, %v1172
        %v1235 = vpop.permute.xlu0 %1234
        %1238 = vset.pattern.permute.xlu0 0
        %1239 = vperm.xlu0 %1238, %v1173
        %v1240 = vpop.permute.xlu0 %1239
        %1243 = vset.pattern.permute.xlu0 0
        %1244 = vperm.xlu0 %1243, %v1174
        %v1245 = vpop.permute.xlu0 %1244
        %1248 = vset.pattern.permute.xlu0 0
        %1249 = vperm.xlu0 %1248, %v1175
        %v1250 = vpop.permute.xlu0 %1249
        %1253 = vset.pattern.permute.xlu0 0
        %1254 = vperm.xlu0 %1253, %v1176
        %v1255 = vpop.permute.xlu0 %1254
        %1258 = vset.pattern.permute.xlu0 0
        %1259 = vperm.xlu0 %1258, %v1177
        %v1260 = vpop.permute.xlu0 %1259
        %1263 = vset.pattern.permute.xlu0 0
        %1264 = vperm.xlu0 %1263, %v1178
        %v1265 = vpop.permute.xlu0 %1264
        %1268 = vset.pattern.permute.xlu0 0
        %1269 = vperm.xlu0 %1268, %v1179
        %v1270 = vpop.permute.xlu0 %1269
        %1273 = vset.pattern.permute.xlu0 0
        %1274 = vperm.xlu0 %1273, %v1180
        %v1275 = vpop.permute.xlu0 %1274
        %1278 = vset.pattern.permute.xlu0 0
        %1279 = vperm.xlu0 %1278, %v1181
        %v1280 = vpop.permute.xlu0 %1279
        %1283 = vset.pattern.permute.xlu0 0
        %1284 = vperm.xlu0 %1283, %v1182
        %v1285 = vpop.permute.xlu0 %1284
        %1288 = vset.pattern.permute.xlu0 0
        %1289 = vperm.xlu0 %1288, %v1183
        %v1290 = vpop.permute.xlu0 %1289
        %1293 = vset.pattern.permute.xlu0 0
        %1294 = vperm.xlu0 %1293, %v1184
        %v1295 = vpop.permute.xlu0 %1294
        %1298 = vset.pattern.permute.xlu0 0
        %1299 = vperm.xlu0 %1298, %v1185
        %v1300 = vpop.permute.xlu0 %1299
        %1303 = vset.pattern.permute.xlu0 0
        %1304 = vperm.xlu0 %1303, %v1186
        %v1305 = vpop.permute.xlu0 %1304
        %1308 = vset.pattern.permute.xlu0 0
        %1309 = vperm.xlu0 %1308, %v1187
        %v1310 = vpop.permute.xlu0 %1309
        %1313 = vset.pattern.permute.xlu0 0
        %1314 = vperm.xlu0 %1313, %v1188
        %v1315 = vpop.permute.xlu0 %1314
        %1318 = vset.pattern.permute.xlu0 0
        %1319 = vperm.xlu0 %1318, %v1189
        %v1320 = vpop.permute.xlu0 %1319
        %1323 = vset.pattern.permute.xlu0 0
        %1324 = vperm.xlu0 %1323, %v1190
        %v1325 = vpop.permute.xlu0 %1324
        %1328 = vset.pattern.permute.xlu0 0
        %1329 = vperm.xlu0 %1328, %v1191
        %v1330 = vpop.permute.xlu0 %1329
        %1333 = vset.pattern.permute.xlu0 0
        %1334 = vperm.xlu0 %1333, %v1192
        %v1335 = vpop.permute.xlu0 %1334
        %1338 = vset.pattern.permute.xlu0 0
        %1339 = vperm.xlu0 %1338, %v1193
        %v1340 = vpop.permute.xlu0 %1339
        %1343 = vset.pattern.permute.xlu0 0
        %1344 = vperm.xlu0 %1343, %v1194
        %v1345 = vpop.permute.xlu0 %1344
        %1348 = vset.pattern.permute.xlu0 0
        %1349 = vperm.xlu0 %1348, %v1195
        %v1350 = vpop.permute.xlu0 %1349
        %1353 = vset.pattern.permute.xlu0 0
        %1354 = vperm.xlu0 %1353, %v1196
        %v1355 = vpop.permute.xlu0 %1354
        %1357 = vmatprep.subr.mxu0 %v1068
        %1358 = vmatpush1.msra.mxu0 %v1067
        %1359 = vmatprep.subr.mxu0 %v1066
        %1360 = vmatpush1.msra.mxu0 %v1065
        %1361 = vmatprep.subr.mxu0 %v1064
        %1362 = vmatpush1.msra.mxu0 %v1063
        %1363 = vmatprep.subr.mxu0 %v1062
        %1364 = vmatpush1.msra.mxu0 %v1061
        %1365 = vmatprep.subr.mxu0 %v1060
        %1366 = vmatpush1.msra.mxu0 %v1059
        %1367 = vmatprep.subr.mxu0 %v1058
        %1368 = vmatpush1.msra.mxu0 %v1057
        %1369 = vmatprep.subr.mxu0 %v1056
        %1370 = vmatpush1.msra.mxu0 %v1055
        %1371 = vmatprep.subr.mxu0 %v1054
        %1372 = vmatpush1.msra.mxu0 %v1053
        %1373 = vmatprep.subr.mxu0 %v1052
        %1374 = vmatpush1.msra.mxu0 %v1051
        %1375 = vmatprep.subr.mxu0 %v1050
        %1376 = vmatpush1.msra.mxu0 %v1049
        %1377 = vmatprep.subr.mxu0 %v1048
        %1378 = vmatpush1.msra.mxu0 %v1047
        %1379 = vmatprep.subr.mxu0 %v1046
        %1380 = vmatpush1.msra.mxu0 %v1045
        %1381 = vmatprep.subr.mxu0 %v1044
        %1382 = vmatpush1.msra.mxu0 %v1043
        %1383 = vmatprep.subr.mxu0 %v1042
        %1384 = vmatpush1.msra.mxu0 %v1041
        %1385 = vmatprep.subr.mxu0 %v1040
        %1386 = vmatpush1.msra.mxu0 %v1039
        %1387 = vmatprep.subr.mxu0 %v1038
        %1388 = vmatpush1.msra.mxu0 %v1037
        %1389 = vmatprep.subr.mxu0 %v1100
        %1390 = vmatpush2.msra.mxu0 %v1099
        %1391 = vmatprep.subr.mxu0 %v1098
        %1392 = vmatpush2.msra.mxu0 %v1097
        %1393 = vmatprep.subr.mxu0 %v1096
        %1394 = vmatpush2.msra.mxu0 %v1095
        %1395 = vmatprep.subr.mxu0 %v1094
        %1396 = vmatpush2.msra.mxu0 %v1093
        %1397 = vmatprep.subr.mxu0 %v1092
        %1398 = vmatpush2.msra.mxu0 %v1091
        %1399 = vmatprep.subr.mxu0 %v1090
        %1400 = vmatpush2.msra.mxu0 %v1089
        %1401 = vmatprep.subr.mxu0 %v1088
        %1402 = vmatpush2.msra.mxu0 %v1087
        %1403 = vmatprep.subr.mxu0 %v1086
        %1404 = vmatpush2.msra.mxu0 %v1085
        %1405 = vmatprep.subr.mxu0 %v1084
        %1406 = vmatpush2.msra.mxu0 %v1083
        %1407 = vmatprep.subr.mxu0 %v1082
        %1408 = vmatpush2.msra.mxu0 %v1081
        %1409 = vmatprep.subr.mxu0 %v1080
        %1410 = vmatpush2.msra.mxu0 %v1079
        %1411 = vmatprep.subr.mxu0 %v1078
        %1412 = vmatpush2.msra.mxu0 %v1077
        %1413 = vmatprep.subr.mxu0 %v1076
        %1414 = vmatpush2.msra.mxu0 %v1075
        %1415 = vmatprep.subr.mxu0 %v1074
        %1416 = vmatpush2.msra.mxu0 %v1073
        %1417 = vmatprep.subr.mxu0 %v1072
        %1418 = vmatpush2.msra.mxu0 %v1071
        %1419 = vmatprep.subr.mxu0 %v1070
        %1420 = vmatpush2.msra.mxu0 %v1069
        %1421 = vmatprep.mubr.f32.mxu0 %v1102
        %1422 = vmatmul.mubr.f32.gmra.mxu0 %v1101
        %v1423 = vpop.f32.mrf.mxu0
        %v1424 = vadd.f32 %v1200, %v1423
        %v1425 = vpop.f32.mrf.mxu0
        %v1426 = vadd.f32 %v1200, %v1425
        %1427 = vmatprep.mubr.f32.mxu0 %v1104
        %1428 = vmatmul.mubr.f32.gmra.mxu0 %v1103
        %v1429 = vpop.f32.mrf.mxu0
        %v1430 = vadd.f32 %v1205, %v1429
        %v1431 = vpop.f32.mrf.mxu0
        %v1432 = vadd.f32 %v1205, %v1431
        %1433 = vmatprep.mubr.f32.mxu0 %v1106
        %1434 = vmatmul.mubr.f32.gmra.mxu0 %v1105
        %v1435 = vpop.f32.mrf.mxu0
        %v1436 = vadd.f32 %v1210, %v1435
        %v1437 = vpop.f32.mrf.mxu0
        %v1438 = vadd.f32 %v1210, %v1437
        %1439 = vmatprep.mubr.f32.mxu0 %v1108
        %1440 = vmatmul.mubr.f32.gmra.mxu0 %v1107
        %v1441 = vpop.f32.mrf.mxu0
        %v1442 = vadd.f32 %v1215, %v1441
        %v1443 = vpop.f32.mrf.mxu0
        %v1444 = vadd.f32 %v1215, %v1443
        %1445 = vmatprep.mubr.f32.mxu0 %v1110
        %1446 = vmatmul.mubr.f32.gmra.mxu0 %v1109
        %v1447 = vpop.f32.mrf.mxu0
        %v1448 = vadd.f32 %v1220, %v1447
        %v1449 = vpop.f32.mrf.mxu0
        %v1450 = vadd.f32 %v1220, %v1449
        %1451 = vmatprep.mubr.f32.mxu0 %v1112
        %1452 = vmatmul.mubr.f32.gmra.mxu0 %v1111
        %v1453 = vpop.f32.mrf.mxu0
        %v1454 = vadd.f32 %v1225, %v1453
        %v1455 = vpop.f32.mrf.mxu0
        %v1456 = vadd.f32 %v1225, %v1455
        %1457 = vmatprep.mubr.f32.mxu0 %v1114
        %1458 = vmatmul.mubr.f32.gmra.mxu0 %v1113
        %v1459 = vpop.f32.mrf.mxu0
        %v1460 = vadd.f32 %v1230, %v1459
        %v1461 = vpop.f32.mrf.mxu0
        %v1462 = vadd.f32 %v1230, %v1461
        %1463 = vmatprep.mubr.f32.mxu0 %v1116
        %1464 = vmatmul.mubr.f32.gmra.mxu0 %v1115
        %v1465 = vpop.f32.mrf.mxu0
        %v1466 = vadd.f32 %v1235, %v1465
        %v1467 = vpop.f32.mrf.mxu0
        %v1468 = vadd.f32 %v1235, %v1467
        %1469 = vmatprep.mubr.f32.mxu0 %v1118
        %1470 = vmatmul.mubr.f32.gmra.mxu0 %v1117
        %v1471 = vpop.f32.mrf.mxu0
        %v1472 = vadd.f32 %v1240, %v1471
        %v1473 = vpop.f32.mrf.mxu0
        %v1474 = vadd.f32 %v1240, %v1473
        %1475 = vmatprep.mubr.f32.mxu0 %v1120
        %1476 = vmatmul.mubr.f32.gmra.mxu0 %v1119
        %v1477 = vpop.f32.mrf.mxu0
        %v1478 = vadd.f32 %v1245, %v1477
        %v1479 = vpop.f32.mrf.mxu0
        %v1480 = vadd.f32 %v1245, %v1479
        %1481 = vmatprep.mubr.f32.mxu0 %v1122
        %1482 = vmatmul.mubr.f32.gmra.mxu0 %v1121
        %v1483 = vpop.f32.mrf.mxu0
        %v1484 = vadd.f32 %v1250, %v1483
        %v1485 = vpop.f32.mrf.mxu0
        %v1486 = vadd.f32 %v1250, %v1485
        %1487 = vmatprep.mubr.f32.mxu0 %v1124
        %1488 = vmatmul.mubr.f32.gmra.mxu0 %v1123
        %v1489 = vpop.f32.mrf.mxu0
        %v1490 = vadd.f32 %v1255, %v1489
        %v1491 = vpop.f32.mrf.mxu0
        %v1492 = vadd.f32 %v1255, %v1491
        %1493 = vmatprep.mubr.f32.mxu0 %v1126
        %1494 = vmatmul.mubr.f32.gmra.mxu0 %v1125
        %v1495 = vpop.f32.mrf.mxu0
        %v1496 = vadd.f32 %v1260, %v1495
        %v1497 = vpop.f32.mrf.mxu0
        %v1498 = vadd.f32 %v1260, %v1497
        %1499 = vmatprep.mubr.f32.mxu0 %v1128
        %1500 = vmatmul.mubr.f32.gmra.mxu0 %v1127
        %v1501 = vpop.f32.mrf.mxu0
        %v1502 = vadd.f32 %v1265, %v1501
        %v1503 = vpop.f32.mrf.mxu0
        %v1504 = vadd.f32 %v1265, %v1503
        %1505 = vmatprep.mubr.f32.mxu0 %v1130
        %1506 = vmatmul.mubr.f32.gmra.mxu0 %v1129
        %v1507 = vpop.f32.mrf.mxu0
        %v1508 = vadd.f32 %v1270, %v1507
        %v1509 = vpop.f32.mrf.mxu0
        %v1510 = vadd.f32 %v1270, %v1509
        %1511 = vmatprep.mubr.f32.mxu0 %v1132
        %1512 = vmatmul.mubr.f32.gmra.mxu0 %v1131
        %v1513 = vpop.f32.mrf.mxu0
        %v1514 = vadd.f32 %v1275, %v1513
        %v1515 = vpop.f32.mrf.mxu0
        %v1516 = vadd.f32 %v1275, %v1515
        %1517 = vmatprep.mubr.f32.mxu0 %v1134
        %1518 = vmatmul.mubr.f32.gmra.mxu0 %v1133
        %v1519 = vpop.f32.mrf.mxu0
        %v1520 = vadd.f32 %v1280, %v1519
        %v1521 = vpop.f32.mrf.mxu0
        %v1522 = vadd.f32 %v1280, %v1521
        %1523 = vmatprep.mubr.f32.mxu0 %v1136
        %1524 = vmatmul.mubr.f32.gmra.mxu0 %v1135
        %v1525 = vpop.f32.mrf.mxu0
        %v1526 = vadd.f32 %v1285, %v1525
        %v1527 = vpop.f32.mrf.mxu0
        %v1528 = vadd.f32 %v1285, %v1527
        %1529 = vmatprep.mubr.f32.mxu0 %v1138
        %1530 = vmatmul.mubr.f32.gmra.mxu0 %v1137
        %v1531 = vpop.f32.mrf.mxu0
        %v1532 = vadd.f32 %v1290, %v1531
        %v1533 = vpop.f32.mrf.mxu0
        %v1534 = vadd.f32 %v1290, %v1533
        %1535 = vmatprep.mubr.f32.mxu0 %v1140
        %1536 = vmatmul.mubr.f32.gmra.mxu0 %v1139
        %v1537 = vpop.f32.mrf.mxu0
        %v1538 = vadd.f32 %v1295, %v1537
        %v1539 = vpop.f32.mrf.mxu0
        %v1540 = vadd.f32 %v1295, %v1539
        %1541 = vmatprep.mubr.f32.mxu0 %v1142
        %1542 = vmatmul.mubr.f32.gmra.mxu0 %v1141
        %v1543 = vpop.f32.mrf.mxu0
        %v1544 = vadd.f32 %v1300, %v1543
        %v1545 = vpop.f32.mrf.mxu0
        %v1546 = vadd.f32 %v1300, %v1545
        %1547 = vmatprep.mubr.f32.mxu0 %v1144
        %1548 = vmatmul.mubr.f32.gmra.mxu0 %v1143
        %v1549 = vpop.f32.mrf.mxu0
        %v1550 = vadd.f32 %v1305, %v1549
        %v1551 = vpop.f32.mrf.mxu0
        %v1552 = vadd.f32 %v1305, %v1551
        %1553 = vmatprep.mubr.f32.mxu0 %v1146
        %1554 = vmatmul.mubr.f32.gmra.mxu0 %v1145
        %v1555 = vpop.f32.mrf.mxu0
        %v1556 = vadd.f32 %v1310, %v1555
        %v1557 = vpop.f32.mrf.mxu0
        %v1558 = vadd.f32 %v1310, %v1557
        %1559 = vmatprep.mubr.f32.mxu0 %v1148
        %1560 = vmatmul.mubr.f32.gmra.mxu0 %v1147
        %v1561 = vpop.f32.mrf.mxu0
        %v1562 = vadd.f32 %v1315, %v1561
        %v1563 = vpop.f32.mrf.mxu0
        %v1564 = vadd.f32 %v1315, %v1563
        %1565 = vmatprep.mubr.f32.mxu0 %v1150
        %1566 = vmatmul.mubr.f32.gmra.mxu0 %v1149
        %v1567 = vpop.f32.mrf.mxu0
        %v1568 = vadd.f32 %v1320, %v1567
        %v1569 = vpop.f32.mrf.mxu0
        %v1570 = vadd.f32 %v1320, %v1569
        %1571 = vmatprep.mubr.f32.mxu0 %v1152
        %1572 = vmatmul.mubr.f32.gmra.mxu0 %v1151
        %v1573 = vpop.f32.mrf.mxu0
        %v1574 = vadd.f32 %v1325, %v1573
        %v1575 = vpop.f32.mrf.mxu0
        %v1576 = vadd.f32 %v1325, %v1575
        %1577 = vmatprep.mubr.f32.mxu0 %v1154
        %1578 = vmatmul.mubr.f32.gmra.mxu0 %v1153
        %v1579 = vpop.f32.mrf.mxu0
        %v1580 = vadd.f32 %v1330, %v1579
        %v1581 = vpop.f32.mrf.mxu0
        %v1582 = vadd.f32 %v1330, %v1581
        %1583 = vmatprep.mubr.f32.mxu0 %v1156
        %1584 = vmatmul.mubr.f32.gmra.mxu0 %v1155
        %v1585 = vpop.f32.mrf.mxu0
        %v1586 = vadd.f32 %v1335, %v1585
        %v1587 = vpop.f32.mrf.mxu0
        %v1588 = vadd.f32 %v1335, %v1587
        %1589 = vmatprep.mubr.f32.mxu0 %v1158
        %1590 = vmatmul.mubr.f32.gmra.mxu0 %v1157
        %v1591 = vpop.f32.mrf.mxu0
        %v1592 = vadd.f32 %v1340, %v1591
        %v1593 = vpop.f32.mrf.mxu0
        %v1594 = vadd.f32 %v1340, %v1593
        %1595 = vmatprep.mubr.f32.mxu0 %v1160
        %1596 = vmatmul.mubr.f32.gmra.mxu0 %v1159
        %v1597 = vpop.f32.mrf.mxu0
        %v1598 = vadd.f32 %v1345, %v1597
        %v1599 = vpop.f32.mrf.mxu0
        %v1600 = vadd.f32 %v1345, %v1599
        %1601 = vmatprep.mubr.f32.mxu0 %v1162
        %1602 = vmatmul.mubr.f32.gmra.mxu0 %v1161
        %v1603 = vpop.f32.mrf.mxu0
        %v1604 = vadd.f32 %v1350, %v1603
        %v1605 = vpop.f32.mrf.mxu0
        %v1606 = vadd.f32 %v1350, %v1605
        %1607 = vmatprep.mubr.f32.mxu0 %v1164
        %1608 = vmatmul.mubr.f32.gmra.mxu0 %v1163
        %v1609 = vpop.f32.mrf.mxu0
        %v1610 = vadd.f32 %v1355, %v1609
        %v1611 = vpop.f32.mrf.mxu0
        %v1612 = vadd.f32 %v1355, %v1611
        %1613 = vdwg.mxu0
        %v1614 = vtanh.pop %v1424
        %v1615 = vtanh.pop %v1426
        %v1616 = vtanh.pop %v1430
        %v1617 = vtanh.pop %v1432
        %v1618 = vtanh.pop %v1436
        %v1619 = vtanh.pop %v1438
        %v1620 = vtanh.pop %v1442
        %v1621 = vtanh.pop %v1444
        %v1622 = vtanh.pop %v1448
        %v1623 = vtanh.pop %v1450
        %v1624 = vtanh.pop %v1454
        %v1625 = vtanh.pop %v1456
        %v1626 = vtanh.pop %v1460
        %v1627 = vtanh.pop %v1462
        %v1628 = vtanh.pop %v1466
        %v1629 = vtanh.pop %v1468
        %v1630 = vtanh.pop %v1472
        %v1631 = vtanh.pop %v1474
        %v1632 = vtanh.pop %v1478
        %v1633 = vtanh.pop %v1480
        %v1634 = vtanh.pop %v1484
        %v1635 = vtanh.pop %v1486
        %v1636 = vtanh.pop %v1490
        %v1637 = vtanh.pop %v1492
        %v1638 = vtanh.pop %v1496
        %v1639 = vtanh.pop %v1498
        %v1640 = vtanh.pop %v1502
        %v1641 = vtanh.pop %v1504
        %v1642 = vtanh.pop %v1508
        %v1643 = vtanh.pop %v1510
        %v1644 = vtanh.pop %v1514
        %v1645 = vtanh.pop %v1516
        %v1646 = vtanh.pop %v1520
        %v1647 = vtanh.pop %v1522
        %v1648 = vtanh.pop %v1526
        %v1649 = vtanh.pop %v1528
        %v1650 = vtanh.pop %v1532
        %v1651 = vtanh.pop %v1534
        %v1652 = vtanh.pop %v1538
        %v1653 = vtanh.pop %v1540
        %v1654 = vtanh.pop %v1544
        %v1655 = vtanh.pop %v1546
        %v1656 = vtanh.pop %v1550
        %v1657 = vtanh.pop %v1552
        %v1658 = vtanh.pop %v1556
        %v1659 = vtanh.pop %v1558
        %v1660 = vtanh.pop %v1562
        %v1661 = vtanh.pop %v1564
        %v1662 = vtanh.pop %v1568
        %v1663 = vtanh.pop %v1570
        %v1664 = vtanh.pop %v1574
        %v1665 = vtanh.pop %v1576
        %v1666 = vtanh.pop %v1580
        %v1667 = vtanh.pop %v1582
        %v1668 = vtanh.pop %v1586
        %v1669 = vtanh.pop %v1588
        %v1670 = vtanh.pop %v1592
        %v1671 = vtanh.pop %v1594
        %v1672 = vtanh.pop %v1598
        %v1673 = vtanh.pop %v1600
        %v1674 = vtanh.pop %v1604
        %v1675 = vtanh.pop %v1606
        %v1676 = vtanh.pop %v1610
        %v1677 = vtanh.pop %v1612
        %v1678 = vld [vmem:[#allocation10] sm:$0xff]
        %v1679 = vld [vmem:[#allocation10 + $0x8] sm:$0xff]
        %v1680 = vld [vmem:[#allocation10 + $0x10] sm:$0xff]
        %v1681 = vld [vmem:[#allocation10 + $0x18] sm:$0xff]
        %v1682 = vld [vmem:[#allocation10 + $0x20] sm:$0xff]
        %v1683 = vld [vmem:[#allocation10 + $0x28] sm:$0xff]
        %v1684 = vld [vmem:[#allocation10 + $0x30] sm:$0xff]
        %v1685 = vld [vmem:[#allocation10 + $0x38] sm:$0xff]
        %v1686 = vld [vmem:[#allocation10 + $0x40] sm:$0xff]
        %v1687 = vld [vmem:[#allocation10 + $0x48] sm:$0xff]
        %v1688 = vld [vmem:[#allocation10 + $0x50] sm:$0xff]
        %v1689 = vld [vmem:[#allocation10 + $0x58] sm:$0xff]
        %v1690 = vld [vmem:[#allocation10 + $0x60] sm:$0xff]
        %v1691 = vld [vmem:[#allocation10 + $0x68] sm:$0xff]
        %v1692 = vld [vmem:[#allocation10 + $0x70] sm:$0xff]
        %v1693 = vld [vmem:[#allocation10 + $0x78] sm:$0xff]
        %v1694 = vld [vmem:[#allocation10 + $0x80] sm:$0xff]
        %v1695 = vld [vmem:[#allocation10 + $0x88] sm:$0xff]
        %v1696 = vld [vmem:[#allocation10 + $0x90] sm:$0xff]
        %v1697 = vld [vmem:[#allocation10 + $0x98] sm:$0xff]
        %v1698 = vld [vmem:[#allocation10 + $0xa0] sm:$0xff]
        %v1699 = vld [vmem:[#allocation10 + $0xa8] sm:$0xff]
        %v1700 = vld [vmem:[#allocation10 + $0xb0] sm:$0xff]
        %v1701 = vld [vmem:[#allocation10 + $0xb8] sm:$0xff]
        %v1702 = vld [vmem:[#allocation10 + $0xc0] sm:$0xff]
        %v1703 = vld [vmem:[#allocation10 + $0xc8] sm:$0xff]
        %v1704 = vld [vmem:[#allocation10 + $0xd0] sm:$0xff]
        %v1705 = vld [vmem:[#allocation10 + $0xd8] sm:$0xff]
        %v1706 = vld [vmem:[#allocation10 + $0xe0] sm:$0xff]
        %v1707 = vld [vmem:[#allocation10 + $0xe8] sm:$0xff]
        %v1708 = vld [vmem:[#allocation10 + $0xf0] sm:$0xff]
        %v1709 = vld [vmem:[#allocation10 + $0xf8] sm:$0xff]
        %v1710 = vld [vmem:[%s7] sm:$0xff]
        %1712 = vset.pattern.permute.xlu0 0
        %1713 = vperm.xlu0 %1712, %v1678
        %v1714 = vpop.permute.xlu0 %1713
        %1717 = vset.pattern.permute.xlu0 0
        %1718 = vperm.xlu0 %1717, %v1679
        %v1719 = vpop.permute.xlu0 %1718
        %1722 = vset.pattern.permute.xlu0 0
        %1723 = vperm.xlu0 %1722, %v1680
        %v1724 = vpop.permute.xlu0 %1723
        %1727 = vset.pattern.permute.xlu0 0
        %1728 = vperm.xlu0 %1727, %v1681
        %v1729 = vpop.permute.xlu0 %1728
        %1732 = vset.pattern.permute.xlu0 0
        %1733 = vperm.xlu0 %1732, %v1682
        %v1734 = vpop.permute.xlu0 %1733
        %1737 = vset.pattern.permute.xlu0 0
        %1738 = vperm.xlu0 %1737, %v1683
        %v1739 = vpop.permute.xlu0 %1738
        %1742 = vset.pattern.permute.xlu0 0
        %1743 = vperm.xlu0 %1742, %v1684
        %v1744 = vpop.permute.xlu0 %1743
        %1747 = vset.pattern.permute.xlu0 0
        %1748 = vperm.xlu0 %1747, %v1685
        %v1749 = vpop.permute.xlu0 %1748
        %1752 = vset.pattern.permute.xlu0 0
        %1753 = vperm.xlu0 %1752, %v1686
        %v1754 = vpop.permute.xlu0 %1753
        %1757 = vset.pattern.permute.xlu0 0
        %1758 = vperm.xlu0 %1757, %v1687
        %v1759 = vpop.permute.xlu0 %1758
        %1762 = vset.pattern.permute.xlu0 0
        %1763 = vperm.xlu0 %1762, %v1688
        %v1764 = vpop.permute.xlu0 %1763
        %1767 = vset.pattern.permute.xlu0 0
        %1768 = vperm.xlu0 %1767, %v1689
        %v1769 = vpop.permute.xlu0 %1768
        %1772 = vset.pattern.permute.xlu0 0
        %1773 = vperm.xlu0 %1772, %v1690
        %v1774 = vpop.permute.xlu0 %1773
        %1777 = vset.pattern.permute.xlu0 0
        %1778 = vperm.xlu0 %1777, %v1691
        %v1779 = vpop.permute.xlu0 %1778
        %1782 = vset.pattern.permute.xlu0 0
        %1783 = vperm.xlu0 %1782, %v1692
        %v1784 = vpop.permute.xlu0 %1783
        %1787 = vset.pattern.permute.xlu0 0
        %1788 = vperm.xlu0 %1787, %v1693
        %v1789 = vpop.permute.xlu0 %1788
        %1792 = vset.pattern.permute.xlu0 0
        %1793 = vperm.xlu0 %1792, %v1694
        %v1794 = vpop.permute.xlu0 %1793
        %1797 = vset.pattern.permute.xlu0 0
        %1798 = vperm.xlu0 %1797, %v1695
        %v1799 = vpop.permute.xlu0 %1798
        %1802 = vset.pattern.permute.xlu0 0
        %1803 = vperm.xlu0 %1802, %v1696
        %v1804 = vpop.permute.xlu0 %1803
        %1807 = vset.pattern.permute.xlu0 0
        %1808 = vperm.xlu0 %1807, %v1697
        %v1809 = vpop.permute.xlu0 %1808
        %1812 = vset.pattern.permute.xlu0 0
        %1813 = vperm.xlu0 %1812, %v1698
        %v1814 = vpop.permute.xlu0 %1813
        %1817 = vset.pattern.permute.xlu0 0
        %1818 = vperm.xlu0 %1817, %v1699
        %v1819 = vpop.permute.xlu0 %1818
        %1822 = vset.pattern.permute.xlu0 0
        %1823 = vperm.xlu0 %1822, %v1700
        %v1824 = vpop.permute.xlu0 %1823
        %1827 = vset.pattern.permute.xlu0 0
        %1828 = vperm.xlu0 %1827, %v1701
        %v1829 = vpop.permute.xlu0 %1828
        %1832 = vset.pattern.permute.xlu0 0
        %1833 = vperm.xlu0 %1832, %v1702
        %v1834 = vpop.permute.xlu0 %1833
        %1837 = vset.pattern.permute.xlu0 0
        %1838 = vperm.xlu0 %1837, %v1703
        %v1839 = vpop.permute.xlu0 %1838
        %1842 = vset.pattern.permute.xlu0 0
        %1843 = vperm.xlu0 %1842, %v1704
        %v1844 = vpop.permute.xlu0 %1843
        %1847 = vset.pattern.permute.xlu0 0
        %1848 = vperm.xlu0 %1847, %v1705
        %v1849 = vpop.permute.xlu0 %1848
        %1852 = vset.pattern.permute.xlu0 0
        %1853 = vperm.xlu0 %1852, %v1706
        %v1854 = vpop.permute.xlu0 %1853
        %1857 = vset.pattern.permute.xlu0 0
        %1858 = vperm.xlu0 %1857, %v1707
        %v1859 = vpop.permute.xlu0 %1858
        %1862 = vset.pattern.permute.xlu0 0
        %1863 = vperm.xlu0 %1862, %v1708
        %v1864 = vpop.permute.xlu0 %1863
        %1867 = vset.pattern.permute.xlu0 0
        %1868 = vperm.xlu0 %1867, %v1709
        %v1869 = vpop.permute.xlu0 %1868
        %v1871 = vmul.f32 %v1714, %v1614
        %v1872 = vmul.f32 %v1714, %v1615
        %v1873 = vmul.f32 %v1719, %v1616
        %v1874 = vmul.f32 %v1719, %v1617
        %v1875 = vmul.f32 %v1724, %v1618
        %v1876 = vmul.f32 %v1724, %v1619
        %v1877 = vmul.f32 %v1729, %v1620
        %v1878 = vmul.f32 %v1729, %v1621
        %v1879 = vmul.f32 %v1734, %v1622
        %v1880 = vmul.f32 %v1734, %v1623
        %v1881 = vmul.f32 %v1739, %v1624
        %v1882 = vmul.f32 %v1739, %v1625
        %v1883 = vmul.f32 %v1744, %v1626
        %v1884 = vmul.f32 %v1744, %v1627
        %v1885 = vmul.f32 %v1749, %v1628
        %v1886 = vmul.f32 %v1749, %v1629
        %v1887 = vmul.f32 %v1754, %v1630
        %v1888 = vmul.f32 %v1754, %v1631
        %v1889 = vmul.f32 %v1759, %v1632
        %v1890 = vmul.f32 %v1759, %v1633
        %v1891 = vmul.f32 %v1764, %v1634
        %v1892 = vmul.f32 %v1764, %v1635
        %v1893 = vmul.f32 %v1769, %v1636
        %v1894 = vmul.f32 %v1769, %v1637
        %v1895 = vmul.f32 %v1774, %v1638
        %v1896 = vmul.f32 %v1774, %v1639
        %v1897 = vmul.f32 %v1779, %v1640
        %v1898 = vmul.f32 %v1779, %v1641
        %v1899 = vmul.f32 %v1784, %v1642
        %v1900 = vmul.f32 %v1784, %v1643
        %v1901 = vmul.f32 %v1789, %v1644
        %v1902 = vmul.f32 %v1789, %v1645
        %v1903 = vmul.f32 %v1794, %v1646
        %v1904 = vmul.f32 %v1794, %v1647
        %v1905 = vmul.f32 %v1799, %v1648
        %v1906 = vmul.f32 %v1799, %v1649
        %v1907 = vmul.f32 %v1804, %v1650
        %v1908 = vmul.f32 %v1804, %v1651
        %v1909 = vmul.f32 %v1809, %v1652
        %v1910 = vmul.f32 %v1809, %v1653
        %v1911 = vmul.f32 %v1814, %v1654
        %v1912 = vmul.f32 %v1814, %v1655
        %v1913 = vmul.f32 %v1819, %v1656
        %v1914 = vmul.f32 %v1819, %v1657
        %v1915 = vmul.f32 %v1824, %v1658
        %v1916 = vmul.f32 %v1824, %v1659
        %v1917 = vmul.f32 %v1829, %v1660
        %v1918 = vmul.f32 %v1829, %v1661
        %v1919 = vmul.f32 %v1834, %v1662
        %v1920 = vmul.f32 %v1834, %v1663
        %v1921 = vmul.f32 %v1839, %v1664
        %v1922 = vmul.f32 %v1839, %v1665
        %v1923 = vmul.f32 %v1844, %v1666
        %v1924 = vmul.f32 %v1844, %v1667
        %v1925 = vmul.f32 %v1849, %v1668
        %v1926 = vmul.f32 %v1849, %v1669
        %v1927 = vmul.f32 %v1854, %v1670
        %v1928 = vmul.f32 %v1854, %v1671
        %v1929 = vmul.f32 %v1859, %v1672
        %v1930 = vmul.f32 %v1859, %v1673
        %v1931 = vmul.f32 %v1864, %v1674
        %v1932 = vmul.f32 %v1864, %v1675
        %v1933 = vmul.f32 %v1869, %v1676
        %v1934 = vmul.f32 %v1869, %v1677
        %v1935 = vadd.f32 %v1871, %v1873
        %v1936 = vadd.f32 %v1935, %v1875
        %v1937 = vadd.f32 %v1936, %v1877
        %v1938 = vrot.slane %v1937, 4
        %v1939 = vadd.f32 %v1937, %v1938
        %v1940 = vrot.slane %v1939, 2
        %v1941 = vadd.f32 %v1939, %v1940
        %v1942 = vrot.slane %v1941, 1
        %v1943 = vadd.f32 %v1941, %v1942
        %v1944 = vadd.f32 %v1872, %v1874
        %v1945 = vadd.f32 %v1944, %v1876
        %v1946 = vadd.f32 %v1945, %v1878
        %v1947 = vrot.slane %v1946, 4
        %v1948 = vadd.f32 %v1946, %v1947
        %v1949 = vrot.slane %v1948, 2
        %v1950 = vadd.f32 %v1948, %v1949
        %v1951 = vrot.slane %v1950, 1
        %v1952 = vadd.f32 %v1950, %v1951
        %v1953 = vadd.f32 %v1879, %v1881
        %v1954 = vadd.f32 %v1953, %v1883
        %v1955 = vadd.f32 %v1954, %v1885
        %v1956 = vrot.slane %v1955, 4
        %v1957 = vadd.f32 %v1955, %v1956
        %v1958 = vrot.slane %v1957, 2
        %v1959 = vadd.f32 %v1957, %v1958
        %v1960 = vrot.slane %v1959, 1
        %v1961 = vadd.f32 %v1959, %v1960
        %v1962 = vadd.f32 %v1880, %v1882
        %v1963 = vadd.f32 %v1962, %v1884
        %v1964 = vadd.f32 %v1963, %v1886
        %v1965 = vrot.slane %v1964, 4
        %v1966 = vadd.f32 %v1964, %v1965
        %v1967 = vrot.slane %v1966, 2
        %v1968 = vadd.f32 %v1966, %v1967
        %v1969 = vrot.slane %v1968, 1
        %v1970 = vadd.f32 %v1968, %v1969
        %v1971 = vadd.f32 %v1887, %v1889
        %v1972 = vadd.f32 %v1971, %v1891
        %v1973 = vadd.f32 %v1972, %v1893
        %v1974 = vrot.slane %v1973, 4
        %v1975 = vadd.f32 %v1973, %v1974
        %v1976 = vrot.slane %v1975, 2
        %v1977 = vadd.f32 %v1975, %v1976
        %v1978 = vrot.slane %v1977, 1
        %v1979 = vadd.f32 %v1977, %v1978
        %v1980 = vadd.f32 %v1888, %v1890
        %v1981 = vadd.f32 %v1980, %v1892
        %v1982 = vadd.f32 %v1981, %v1894
        %v1983 = vrot.slane %v1982, 4
        %v1984 = vadd.f32 %v1982, %v1983
        %v1985 = vrot.slane %v1984, 2
        %v1986 = vadd.f32 %v1984, %v1985
        %v1987 = vrot.slane %v1986, 1
        %v1988 = vadd.f32 %v1986, %v1987
        %v1989 = vadd.f32 %v1895, %v1897
        %v1990 = vadd.f32 %v1989, %v1899
        %v1991 = vadd.f32 %v1990, %v1901
        %v1992 = vrot.slane %v1991, 4
        %v1993 = vadd.f32 %v1991, %v1992
        %v1994 = vrot.slane %v1993, 2
        %v1995 = vadd.f32 %v1993, %v1994
        %v1996 = vrot.slane %v1995, 1
        %v1997 = vadd.f32 %v1995, %v1996
        %v1998 = vadd.f32 %v1896, %v1898
        %v1999 = vadd.f32 %v1998, %v1900
        %v2000 = vadd.f32 %v1999, %v1902
        %v2001 = vrot.slane %v2000, 4
        %v2002 = vadd.f32 %v2000, %v2001
        %v2003 = vrot.slane %v2002, 2
        %v2004 = vadd.f32 %v2002, %v2003
        %v2005 = vrot.slane %v2004, 1
        %v2006 = vadd.f32 %v2004, %v2005
        %v2007 = vadd.f32 %v1903, %v1905
        %v2008 = vadd.f32 %v2007, %v1907
        %v2009 = vadd.f32 %v2008, %v1909
        %v2010 = vrot.slane %v2009, 4
        %v2011 = vadd.f32 %v2009, %v2010
        %v2012 = vrot.slane %v2011, 2
        %v2013 = vadd.f32 %v2011, %v2012
        %v2014 = vrot.slane %v2013, 1
        %v2015 = vadd.f32 %v2013, %v2014
        %v2016 = vadd.f32 %v1904, %v1906
        %v2017 = vadd.f32 %v2016, %v1908
        %v2018 = vadd.f32 %v2017, %v1910
        %v2019 = vrot.slane %v2018, 4
        %v2020 = vadd.f32 %v2018, %v2019
        %v2021 = vrot.slane %v2020, 2
        %v2022 = vadd.f32 %v2020, %v2021
        %v2023 = vrot.slane %v2022, 1
        %v2024 = vadd.f32 %v2022, %v2023
        %v2025 = vadd.f32 %v1911, %v1913
        %v2026 = vadd.f32 %v2025, %v1915
        %v2027 = vadd.f32 %v2026, %v1917
        %v2028 = vrot.slane %v2027, 4
        %v2029 = vadd.f32 %v2027, %v2028
        %v2030 = vrot.slane %v2029, 2
        %v2031 = vadd.f32 %v2029, %v2030
        %v2032 = vrot.slane %v2031, 1
        %v2033 = vadd.f32 %v2031, %v2032
        %v2034 = vadd.f32 %v1912, %v1914
        %v2035 = vadd.f32 %v2034, %v1916
        %v2036 = vadd.f32 %v2035, %v1918
        %v2037 = vrot.slane %v2036, 4
        %v2038 = vadd.f32 %v2036, %v2037
        %v2039 = vrot.slane %v2038, 2
        %v2040 = vadd.f32 %v2038, %v2039
        %v2041 = vrot.slane %v2040, 1
        %v2042 = vadd.f32 %v2040, %v2041
        %v2043 = vadd.f32 %v1919, %v1921
        %v2044 = vadd.f32 %v2043, %v1923
        %v2045 = vadd.f32 %v2044, %v1925
        %v2046 = vrot.slane %v2045, 4
        %v2047 = vadd.f32 %v2045, %v2046
        %v2048 = vrot.slane %v2047, 2
        %v2049 = vadd.f32 %v2047, %v2048
        %v2050 = vrot.slane %v2049, 1
        %v2051 = vadd.f32 %v2049, %v2050
        %v2052 = vadd.f32 %v1920, %v1922
        %v2053 = vadd.f32 %v2052, %v1924
        %v2054 = vadd.f32 %v2053, %v1926
        %v2055 = vrot.slane %v2054, 4
        %v2056 = vadd.f32 %v2054, %v2055
        %v2057 = vrot.slane %v2056, 2
        %v2058 = vadd.f32 %v2056, %v2057
        %v2059 = vrot.slane %v2058, 1
        %v2060 = vadd.f32 %v2058, %v2059
        %v2061 = vadd.f32 %v1927, %v1929
        %v2062 = vadd.f32 %v2061, %v1931
        %v2063 = vadd.f32 %v2062, %v1933
        %v2064 = vrot.slane %v2063, 4
        %v2065 = vadd.f32 %v2063, %v2064
        %v2066 = vrot.slane %v2065, 2
        %v2067 = vadd.f32 %v2065, %v2066
        %v2068 = vrot.slane %v2067, 1
        %v2069 = vadd.f32 %v2067, %v2068
        %v2070 = vadd.f32 %v1928, %v1930
        %v2071 = vadd.f32 %v2070, %v1932
        %v2072 = vadd.f32 %v2071, %v1934
        %v2073 = vrot.slane %v2072, 4
        %v2074 = vadd.f32 %v2072, %v2073
        %v2075 = vrot.slane %v2074, 2
        %v2076 = vadd.f32 %v2074, %v2075
        %v2077 = vrot.slane %v2076, 1
        %v2078 = vadd.f32 %v2076, %v2077
        %2080 = vset.pattern.permute.xlu0 0
        %2081 = vperm.xlu0 %2080, %v1710
        %v2082 = vpop.permute.xlu0 %2081
        %v2083 = vrot.slane %v2082, 1
        %v2084 = vrot.slane %v2082, 2
        %v2085 = vrot.slane %v2082, 3
        %v2086 = vrot.slane %v2082, 4
        %v2087 = vrot.slane %v2082, 5
        %v2088 = vrot.slane %v2082, 6
        %v2089 = vrot.slane %v2082, 7
        %v2098 = vadd.f32 %v1943, %v2082
        %v2099 = vadd.f32 %v1952, %v2082
        %v2100 = vadd.f32 %v1961, %v2083
        %v2101 = vadd.f32 %v1970, %v2083
        %v2102 = vadd.f32 %v1979, %v2084
        %v2103 = vadd.f32 %v1988, %v2084
        %v2104 = vadd.f32 %v1997, %v2085
        %v2105 = vadd.f32 %v2006, %v2085
        %v2106 = vadd.f32 %v2015, %v2086
        %v2107 = vadd.f32 %v2024, %v2086
        %v2108 = vadd.f32 %v2033, %v2087
        %v2109 = vadd.f32 %v2042, %v2087
        %v2110 = vadd.f32 %v2051, %v2088
        %v2111 = vadd.f32 %v2060, %v2088
        %v2112 = vadd.f32 %v2069, %v2089
        %v2113 = vadd.f32 %v2078, %v2089
        %v2114 = vld [vmem:[%s383] sm:$0x3]
        %v2115 = vld [vmem:[#allocation2] sm:$0xff]
        %v2117 = vlaneseq
        %v2118 = vshrl.u32 %v2117, 7
        %v2119 = vsub.s32 0, %v2118
        %v2120 = vrot.slane %v2114, %v2119
        %v2121 = vlaneseq
        %v2122 = vshrl.u32 %v2121, 7
        %v2123 = vsub.s32 1, %v2122
        %v2124 = vrot.slane %v2114, %v2123
        %v2143 = vrot.slane %v2100, 7
        %vm2144 = vcmask 1041409
        %v2145 = vsel %vm2144, %v2143, %v2098
        %v2146 = vrot.slane %v2102, 6
        %vm2147 = vcmask 1042434
        %v2148 = vsel %vm2147, %v2146, %v2145
        %v2149 = vrot.slane %v2104, 5
        %vm2150 = vcmask 1043459
        %v2151 = vsel %vm2150, %v2149, %v2148
        %v2152 = vrot.slane %v2106, 4
        %vm2153 = vcmask 1044484
        %v2154 = vsel %vm2153, %v2152, %v2151
        %v2155 = vrot.slane %v2108, 3
        %vm2156 = vcmask 1045509
        %v2157 = vsel %vm2156, %v2155, %v2154
        %v2158 = vrot.slane %v2110, 2
        %vm2159 = vcmask 1046534
        %v2160 = vsel %vm2159, %v2158, %v2157
        %v2161 = vrot.slane %v2112, 1
        %vm2162 = vcmask 1047559
        %v2163 = vsel %vm2162, %v2161, %v2160
        %v2164 = vrot.slane %v2101, 7
        %v2165 = vsel %vm2144, %v2164, %v2099
        %v2166 = vrot.slane %v2103, 6
        %v2167 = vsel %vm2147, %v2166, %v2165
        %v2168 = vrot.slane %v2105, 5
        %v2169 = vsel %vm2150, %v2168, %v2167
        %v2170 = vrot.slane %v2107, 4
        %v2171 = vsel %vm2153, %v2170, %v2169
        %v2172 = vrot.slane %v2109, 3
        %v2173 = vsel %vm2156, %v2172, %v2171
        %v2174 = vrot.slane %v2111, 2
        %v2175 = vsel %vm2159, %v2174, %v2173
        %v2176 = vrot.slane %v2113, 1
        %v2177 = vsel %vm2162, %v2176, %v2175
        %v2180 = vmul.f32 %v2120, %v2163
        %v2181 = vmul.f32 %v2124, %v2177
        %v2182 = vmul.f32 %v2180, %v2163
        %v2183 = vmul.f32 %v2181, %v2177
        %v2184 = vadd.f32 %v2182, %v2183
        %2185 = vadd.xlane.f32.xlu0 %v2184
        %v2186 = vpop.xlane.xlu0 %2185
        %v2187 = vadd.f32 %v2115, %v2186
        %vm2188 = vcmask 7168
        %2189 = vst.msk [vmem:[#allocation2] sm:$0xff] %vm2188, %v2187
        %s2190 = smul.u32 %s22, 2
        %s2191 = smul.addr %s2190, 8
        %s2192 = scalar_lea.vmem %s8, %s2191
        %2193 = vst [vmem:[%s2192] sm:$0xff] %v2163
        %2194 = vst [vmem:[%s2192 + $0x8] sm:$0xff] %v2177
        %p2195 = scmp.eq.s32.totalorder %s22, 3
        // Predicated region
        $region77: #{forward.1} parent=51 // pred_check
          %p2196 = pneg %p2195
        $region78: #{forward.1} parent=51 // pred_check_branch
          %2198 = sbr.rel (%p2196) target = $region80
        $region79: #{forward.1} parent=51 // pred_region
          %v2199 = vld [vmem:[#allocation2] sm:$0xff]
          %v2200 = vrsqrt.pop %v2199
          %v2201 = vld [vmem:[%s8] sm:$0xff]
          %v2202 = vld [vmem:[%s8 + $0x8] sm:$0xff]
          %v2203 = vld [vmem:[%s8 + $0x10] sm:$0xff]
          %v2204 = vld [vmem:[%s8 + $0x18] sm:$0xff]
          %v2205 = vld [vmem:[%s8 + $0x20] sm:$0xff]
          %v2206 = vld [vmem:[%s8 + $0x28] sm:$0xff]
          %v2207 = vld [vmem:[%s8 + $0x30] sm:$0xff]
          %v2208 = vld [vmem:[%s8 + $0x38] sm:$0xff]
          %2210 = vset.pattern.permute.xlu0 0
          %2211 = vperm.xlu0 %2210, %v2200
          %v2212 = vpop.permute.xlu0 %2211
          %v2214 = vmul.f32 %v2201, %v2212
          %v2215 = vmul.f32 %v2202, %v2212
          %v2216 = vmul.f32 %v2203, %v2212
          %v2217 = vmul.f32 %v2204, %v2212
          %v2218 = vmul.f32 %v2205, %v2212
          %v2219 = vmul.f32 %v2206, %v2212
          %v2220 = vmul.f32 %v2207, %v2212
          %v2221 = vmul.f32 %v2208, %v2212
          %2222 = vst [vmem:[%s8] sm:$0xff] %v2214
          %2223 = vst [vmem:[%s8 + $0x8] sm:$0xff] %v2215
          %2224 = vst [vmem:[%s8 + $0x10] sm:$0xff] %v2216
          %2225 = vst [vmem:[%s8 + $0x18] sm:$0xff] %v2217
          %2226 = vst [vmem:[%s8 + $0x20] sm:$0xff] %v2218
          %2227 = vst [vmem:[%s8 + $0x28] sm:$0xff] %v2219
          %2228 = vst [vmem:[%s8 + $0x30] sm:$0xff] %v2220
          %2229 = vst [vmem:[%s8 + $0x38] sm:$0xff] %v2221
        $region80: #{forward.1} parent=51 // pred_fallthru
          _
        // Predicated region
        $region81: #{forward.1} parent=51 // pred_check
          %p2230 = pneg %p213
        $region82: #{forward.1} parent=51 // pred_check_branch
          %2232 = sbr.rel (%p2230) target = $region84
        $region83: #{forward.1} parent=51 // pred_region
          _
        $region84: #{forward.1} parent=51 // pred_fallthru
          _
        // Predicated region
        $region85: #{forward.1} parent=51 // pred_check
          %p2233 = pneg %p213
        $region86: #{forward.1} parent=51 // pred_check_branch
          %2235 = sbr.rel (%p2233) target = $region88
        $region87: #{forward.1} parent=51 // pred_region
          _
        $region88: #{forward.1} parent=51 // pred_fallthru
          _
      $region52: #{forward.1} parent=5 // pred_fallthru
        _
      %p2236 = scmp.le.s32.totalorder 2, %s17
      // Predicated region
      $region89: #{forward.1} parent=5 // pred_check
        %p2237 = pneg %p2236
      $region90: #{forward.1} parent=5 // pred_check_branch
        %2239 = sbr.rel (%p2237) target = $region92
      $region91: #{forward.1} parent=5 // pred_region
        %s2240 = ssub.s32 %s17, 2
      $region92: #{forward.1} parent=5 // pred_fallthru
        _
    $region6: #{forward.1} parent=1 // loop_footer
      %s21 = sadd.s32 1, %s17
    $region7: #{forward.1} parent=1 // loop_footer_branch
      %16 = sbr.rel target = $region3
    $region8: #{forward.1} parent=1 // loop_exit
      _
    %2241 = vsyncpa [#allocation4], 1
    %s2242 = scalar_lea.sflag [#allocation4], 1
    %2243 = vsyncpa %s2242, 1
    %2244 = vsyncpa [#allocation6], 1
    %2245 = vsyncpa [#allocation9], 1

</llo_original>
